<compile_context>
chip_gen: v7x
topology: tpu7x:2x2x1
jax: 0.10.0
libtpu: 0.0.40
codegen_flags: <defaults>
</compile_context>

<pallas_src>
import jax
import jax.numpy as jnp
import numpy as np
from jax.experimental import pallas as pl
from jax.experimental.pallas import tpu as pltpu


def mlp_kernel(x_ref, w1_ref, b1_ref, w2_ref, b2_ref, o_ref):
    # Cast the streamed f32 batch tile to bf16 in-register for full MXU rate.
    x = x_ref[...].astype(jnp.bfloat16)

    # Layer 1: (TILE_B, 784) bf16 @ (784, 128) bf16 -> f32 accum on MXU.
    h = jnp.dot(x, w1_ref[...], preferred_element_type=jnp.float32)
    h = jnp.maximum(h + b1_ref[...], 0.0)

    # Layer 2: hidden activations back to bf16 for the MXU, f32 accum.
    logits = jnp.dot(h.astype(jnp.bfloat16), w2_ref[...],
                     preferred_element_type=jnp.float32)
    # Padded output lanes carry a -1e30 bias -> exp() underflows to exactly 0,
    # so the softmax is effectively taken only over the 10 real classes.
    logits = logits + b2_ref[...]

    # Numerically-stable softmax over the last (lane) dim, all in f32.
    m = jnp.max(logits, axis=-1, keepdims=True)
    e = jnp.exp(logits - m)
    s = jnp.sum(e, axis=-1, keepdims=True)
    # Division -> EUP approx reciprocal + VPU multiply (frees the VALU).
    o_ref[...] = (e * pl.reciprocal(s, approx=True)).astype(o_ref.dtype)


def _round_up(n, m):
    return ((n + m - 1) // m) * m


def feed_forward_net(x, w1, b1, w2, b2, *, tile_b=None):
    """x: (B, 784) f32; returns (B, 10) f32 class probabilities."""
    B, D_in = x.shape
    H = w1.shape[1]
    C = w2.shape[1]
    C_pad = 128                       # lane-dense output slab width

    if tile_b is None:
        if B <= 2048:
            # >= 2 grid steps with evenly split real rows (v7x megacore balance),
            # multiple of 8 for the (8, 128) sublane constraint.
            tile_b = max(8, _round_up(pl.cdiv(B, 2), 8))
        else:
            tile_b = 1024
    num_tiles = pl.cdiv(B, tile_b)

    # Small resident operands: bf16 weights, f32 biases, classes padded to 128.
    w1_b = w1.astype(jnp.bfloat16)
    b1_f = b1.astype(jnp.float32)
    w2_p = jnp.zeros((H, C_pad), jnp.bfloat16).at[:, :C].set(
        w2.astype(jnp.bfloat16))
    b2_p = jnp.full((1, C_pad), -1e30, jnp.float32).at[:, :C].set(
        b2.astype(jnp.float32))

    flops = 2 * B * D_in * H + 2 * B * H * C_pad
    bytes_accessed = (B * D_in * 4 + w1_b.size * 2 + b1_f.size * 4
                      + w2_p.size * 2 + b2_p.size * 4 + B * C_pad * 2)
    cost = pl.CostEstimate(flops=flops,
                           transcendentals=B * (C_pad + 1),
                           bytes_accessed=bytes_accessed)

    out = pl.pallas_call(
        mlp_kernel,
        out_shape=jax.ShapeDtypeStruct((B, C_pad), jnp.bfloat16),
        grid_spec=pltpu.PrefetchScalarGridSpec(
            num_scalar_prefetch=0,
            grid=(num_tiles,),
            in_specs=[
                pl.BlockSpec((tile_b, D_in), lambda i: (i, 0)),   # x: batch-tiled stream
                pl.BlockSpec((D_in, H), lambda i: (0, 0)),        # W1: resident
                pl.BlockSpec((1, H), lambda i: (0, 0)),           # b1: resident
                pl.BlockSpec((H, C_pad), lambda i: (0, 0)),       # W2 (padded): resident
                pl.BlockSpec((1, C_pad), lambda i: (0, 0)),       # b2 (padded): resident
            ],
            out_specs=pl.BlockSpec((tile_b, C_pad), lambda i: (i, 0)),
        ),
        compiler_params=pltpu.CompilerParams(
            dimension_semantics=("parallel",),
        ),
        cost_estimate=cost,
    )(x, w1_b, b1_f, w2_p, b2_p)

    return out[:, :C].astype(jnp.float32)


def init_params(key):
    # Deterministic init mirroring the PyTorch module's uniform ranges.
    k1, k2, k3, k4 = jax.random.split(key, 4)
    bound1 = np.sqrt(1.0 / 128.0)
    bound2 = np.sqrt(1.0 / 10.0)
    W1 = jax.random.uniform(k1, (784, 128), jnp.float32, -bound1, bound1)
    b1 = jax.random.uniform(k2, (1, 128), jnp.float32, -bound1, bound1)
    W2 = jax.random.uniform(k3, (128, 10), jnp.float32, -bound2, bound2)
    b2 = jax.random.uniform(k4, (1, 10), jnp.float32, -bound2, bound2)
    return W1, b1, W2, b2


if __name__ == "__main__":
    key = jax.random.PRNGKey(0)
    kx, kp = jax.random.split(key)

    # Ragged batch: 300 rows -> tile_b=152, 2 grid steps (150/150 real rows per
    # step, so both v7x TensorCores get equal work; last block overhangs by 4
    # rows whose (discarded) outputs are masked at writeback).
    B = 300
    x = jax.random.uniform(kx, (B, 784), jnp.float32)
    W1, b1, W2, b2 = init_params(kp)

    out = feed_forward_net(x, W1, b1, W2, b2)
    out = jax.block_until_ready(out)
    assert out.shape == (B, 10)

    # Strict reference: same bf16-input / f32-accumulate arithmetic as the
    # kernel (tolerance covers bf16 output storage + approx reciprocal).
    xb, w1b, w2b = (x.astype(jnp.bfloat16), W1.astype(jnp.bfloat16),
                    W2.astype(jnp.bfloat16))
    h_ref = jnp.maximum(
        jnp.dot(xb, w1b, preferred_element_type=jnp.float32) + b1, 0.0)
    logits_ref = jnp.dot(h_ref.astype(jnp.bfloat16), w2b,
                         preferred_element_type=jnp.float32) + b2
    ref_bf16 = jax.nn.softmax(logits_ref, axis=-1)
    np.testing.assert_allclose(np.asarray(out), np.asarray(ref_bf16),
                               atol=5e-3, rtol=5e-3)

    # Loose sanity check against the full-f32 PyTorch-equivalent forward pass.
    h_f32 = jnp.maximum(x @ W1 + b1, 0.0)
    ref_f32 = jax.nn.softmax(h_f32 @ W2 + b2, axis=-1)
    np.testing.assert_allclose(np.asarray(out), np.asarray(ref_f32),
                               atol=5e-2, rtol=5e-2)

    print("KERNEL_OK")
</pallas_src>

<mosaic_0001>
module attributes {stable_mosaic.version = 11 : i64} {
  func.func @mlp_kernel(%arg0: i32, %arg1: memref<152x784xf32, #tpu.memory_space<vmem>>, %arg2: memref<784x128xbf16, #tpu.memory_space<vmem>>, %arg3: memref<1x128xf32, #tpu.memory_space<vmem>>, %arg4: memref<128x128xbf16, #tpu.memory_space<vmem>>, %arg5: memref<1x128xf32, #tpu.memory_space<vmem>>, %arg6: memref<152x128xbf16, #tpu.memory_space<vmem>>) attributes {dimension_semantics = [#tpu.dimension_semantics<parallel>], iteration_bounds = array<i64: 2>, scalar_prefetch = 0 : i64, scratch_operands = 0 : i64, tpu.core_type = #tpu.core_type<tc>, window_params = [{transform_indices = @transform_0, window_bounds = array<i64: 152, 784>}, {pipeline_mode = #tpu.pipeline_mode<synchronous>, transform_indices = @transform_1, window_bounds = array<i64: 784, 128>}, {pipeline_mode = #tpu.pipeline_mode<synchronous>, transform_indices = @transform_2, window_bounds = array<i64: 1, 128>}, {pipeline_mode = #tpu.pipeline_mode<synchronous>, transform_indices = @transform_3, window_bounds = array<i64: 128, 128>}, {pipeline_mode = #tpu.pipeline_mode<synchronous>, transform_indices = @transform_4, window_bounds = array<i64: 1, 128>}, {transform_indices = @transform_5, window_bounds = array<i64: 152, 128>}]} {
    %c0 = arith.constant 0 : index
    %c0_0 = arith.constant 0 : index
    %0 = vector.load %arg1[%c0, %c0_0] : memref<152x784xf32, #tpu.memory_space<vmem>>, vector<152x784xf32>
    %1 = arith.truncf %0 : vector<152x784xf32> to vector<152x784xbf16>
    %c0_1 = arith.constant 0 : index
    %c0_2 = arith.constant 0 : index
    %2 = vector.load %arg2[%c0_1, %c0_2] : memref<784x128xbf16, #tpu.memory_space<vmem>>, vector<784x128xbf16>
    %cst = arith.constant dense<0.000000e+00> : vector<152x128xf32>
    %3 = tpu.matmul %1, %2, %cst {dimension_numbers = #tpu.dot_dimension_numbers<[1], [0], [0], [1], [0, 0, 1, 1], [], []>} : vector<152x784xbf16>, vector<784x128xbf16>, vector<152x128xf32> -> vector<152x128xf32>
    %c0_3 = arith.constant 0 : index
    %c0_4 = arith.constant 0 : index
    %4 = vector.load %arg3[%c0_3, %c0_4] : memref<1x128xf32, #tpu.memory_space<vmem>>, vector<1x128xf32>
    %5 = vector.broadcast %4 : vector<1x128xf32> to vector<152x128xf32>
    %6 = arith.addf %3, %5 : vector<152x128xf32>
    %cst_5 = arith.constant 0.000000e+00 : f32
    %7 = vector.broadcast %cst_5 : f32 to vector<152x128xf32>
    %8 = arith.maximumf %6, %7 : vector<152x128xf32>
    %9 = arith.truncf %8 : vector<152x128xf32> to vector<152x128xbf16>
    %c0_6 = arith.constant 0 : index
    %c0_7 = arith.constant 0 : index
    %10 = vector.load %arg4[%c0_6, %c0_7] : memref<128x128xbf16, #tpu.memory_space<vmem>>, vector<128x128xbf16>
    %cst_8 = arith.constant dense<0.000000e+00> : vector<152x128xf32>
    %11 = tpu.matmul %9, %10, %cst_8 {dimension_numbers = #tpu.dot_dimension_numbers<[1], [0], [0], [1], [0, 0, 1, 1], [], []>} : vector<152x128xbf16>, vector<128x128xbf16>, vector<152x128xf32> -> vector<152x128xf32>
    %c0_9 = arith.constant 0 : index
    %c0_10 = arith.constant 0 : index
    %12 = vector.load %arg5[%c0_9, %c0_10] : memref<1x128xf32, #tpu.memory_space<vmem>>, vector<1x128xf32>
    %13 = vector.broadcast %12 : vector<1x128xf32> to vector<152x128xf32>
    %14 = arith.addf %11, %13 : vector<152x128xf32>
    %cst_11 = arith.constant dense<0xFF800000> : vector<152xf32>
    %15 = vector.multi_reduction <maximumf>, %14, %cst_11 [1] : vector<152x128xf32> to vector<152xf32>
    %16 = vector.shape_cast %15 : vector<152xf32> to vector<152x1xf32>
    %17 = vector.broadcast %16 : vector<152x1xf32> to vector<152x128xf32>
    %18 = arith.subf %14, %17 : vector<152x128xf32>
    %19 = math.exp %18 : vector<152x128xf32>
    %cst_12 = arith.constant dense<0.000000e+00> : vector<152xf32>
    %20 = vector.multi_reduction <add>, %19, %cst_12 [1] : vector<152x128xf32> to vector<152xf32>
    %21 = vector.shape_cast %20 : vector<152xf32> to vector<152x1xf32>
    %22 = tpu.reciprocal %21 {approx = true} : vector<152x1xf32> -> vector<152x1xf32>
    %23 = vector.broadcast %22 : vector<152x1xf32> to vector<152x128xf32>
    %24 = arith.mulf %19, %23 : vector<152x128xf32>
    %25 = arith.truncf %24 : vector<152x128xf32> to vector<152x128xbf16>
    %c0_13 = arith.constant 0 : index
    %c0_14 = arith.constant 0 : index
    %26 = vector.load %arg6[%c0_13, %c0_14] : memref<152x128xbf16, #tpu.memory_space<vmem>>, vector<152x128xbf16>
    tpu.vector_store %arg6[%c0_13, %c0_14], %25 {strides = array<i32>} : memref<152x128xbf16, #tpu.memory_space<vmem>>, vector<152x128xbf16>,
    return
  }
  func.func @transform_0(%arg0: i32) -> (i32, i32) {
    %c0_i32 = arith.constant 0 : i32
    %c0_i32_0 = arith.constant 0 : i32
    return %arg0, %c0_i32 : i32, i32
  }
  func.func @transform_1(%arg0: i32) -> (i32, i32) {
    %c0_i32 = arith.constant 0 : i32
    %c0_i32_0 = arith.constant 0 : i32
    %c0_i32_1 = arith.constant 0 : i32
    return %c0_i32, %c0_i32_0 : i32, i32
  }
  func.func @transform_2(%arg0: i32) -> (i32, i32) {
    %c0_i32 = arith.constant 0 : i32
    %c0_i32_0 = arith.constant 0 : i32
    %c0_i32_1 = arith.constant 0 : i32
    return %c0_i32, %c0_i32_0 : i32, i32
  }
  func.func @transform_3(%arg0: i32) -> (i32, i32) {
    %c0_i32 = arith.constant 0 : i32
    %c0_i32_0 = arith.constant 0 : i32
    %c0_i32_1 = arith.constant 0 : i32
    return %c0_i32, %c0_i32_0 : i32, i32
  }
  func.func @transform_4(%arg0: i32) -> (i32, i32) {
    %c0_i32 = arith.constant 0 : i32
    %c0_i32_0 = arith.constant 0 : i32
    %c0_i32_1 = arith.constant 0 : i32
    return %c0_i32, %c0_i32_0 : i32, i32
  }
  func.func @transform_5(%arg0: i32) -> (i32, i32) {
    %c0_i32 = arith.constant 0 : i32
    %c0_i32_0 = arith.constant 0 : i32
    return %arg0, %c0_i32 : i32, i32
  }
}

</mosaic_0001>

<llo_original>
// kernel: tpu_custom_call.1
$region0: #{tpu_custom_call.1}
  #allocation0 [shape = 'u32[]', space=smem, size = 0x4, offset = 0x4, fixed_abs, tag = 'smem constant byte address 0x4 - core index']
  #allocation1 [shape = 'u32[144,128]{1,0:T(1,128)}', space=vmem, size = 0x12000, scoped, tag = 'internal scratch']
  %s0 = inlined_call_operand.hbm [shape: f32[300,784], index: 0, kind: input, shape index: {}]
  %s1 = inlined_call_operand.hbm [shape: bf16[784,128], index: 1, kind: input, shape index: {}]
  %s2 = inlined_call_operand.hbm [shape: f32[1,128], index: 2, kind: input, shape index: {}]
  %s3 = inlined_call_operand.hbm [shape: bf16[128,128], index: 3, kind: input, shape index: {}]
  %s4 = inlined_call_operand.hbm [shape: f32[1,128], index: 4, kind: input, shape index: {}]
  %s5 = inlined_call_operand.hbm [shape: bf16[300,128], index: 5, kind: output, shape index: {}]
  %s6 = sld [smem:[#allocation0]]
  $region73: #{tpu_custom_call.1} parent=0
    _
  %s8 = ssub.s32 1, %s6
  %s9 = scalar_select 0, %s8, %s6
  $region1: #{tpu_custom_call.1} parent=0
    #allocation2 [shape = 'u8[1089536]{0}', space=vmem, size = 0x10a000, scoped, tag = 'input window, operand 0']
    #allocation3 [shape = 's32[2]{0}', space=sflag, size = 0x8, scoped, tag = 'scoped memory for tpu_custom_call.1']
    #allocation4 [shape = 's32[2]{0}', space=sflag, size = 0x8, scoped, tag = 'scoped memory for tpu_custom_call.1']
    #allocation5 [shape = 'u8[200704]{0}', space=vmem, size = 0x31000, scoped, tag = 'input window, operand 1, single buffered']
    #allocation6 [shape = 's32[1]{0}', space=sflag, size = 0x4, scoped, tag = 'scoped memory for tpu_custom_call.1']
    #allocation7 [shape = 'u8[512]{0}', space=vmem, size = 0x400, scoped, tag = 'input window, operand 2, single buffered']
    #allocation8 [shape = 'u8[32768]{0}', space=vmem, size = 0x8000, scoped, tag = 'input window, operand 3, single buffered']
    #allocation9 [shape = 's32[1]{0}', space=sflag, size = 0x4, scoped, tag = 'scoped memory for tpu_custom_call.1']
    #allocation10 [shape = 'u8[512]{0}', space=vmem, size = 0x400, scoped, tag = 'input window, operand 4, single buffered']
    #allocation11 [shape = 'u8[77824]{0}', space=vmem, size = 0x13000, scoped, tag = 'output window, operand 0']
    %10 = vsyncpa [#allocation3], 0
    %s11 = scalar_lea.sflag [#allocation3], 1
    %12 = vsyncpa %s11, 0
    %13 = vsyncpa [#allocation6], 0
    %14 = vsyncpa [#allocation9], 0
    %15 = vsyncpa [#allocation4], 0
    %s16 = scalar_lea.sflag [#allocation4], 1
    %17 = vsyncpa %s16, 0
    loop: start=0, step=1, limit=4
    $region2: #{tpu_custom_call.1} parent=1 // loop_pre_header
      _
    $region3: #{tpu_custom_call.1} parent=1 // loop_header
      %s19 = sphi 0, %s23
      %p20 = scmp.ge.s32.totalorder %s19, 4
      %s29 = sphi 0, %s31
      %s32 = sphi 0, %s29
      %s33 = sphi 0, %s32
      %s49 = sphi 0, %s33
      %s53 = sphi 0, %s53
      %s55 = sphi 0, %s53
      %s56 = sphi 0, %s55
      %s70 = sphi 0, %s56
      %s74 = sphi 0, %s74
      %s76 = sphi 0, %s74
      %s77 = sphi 0, %s76
      %s91 = sphi 0, %s77
      %s95 = sphi 0, %s95
      %s97 = sphi 0, %s95
      %s98 = sphi 0, %s97
      %s112 = sphi 0, %s98
      %s116 = sphi 0, %s116
      %s118 = sphi 0, %s116
      %s119 = sphi 0, %s118
      %s133 = sphi 0, %s119
      %s139 = sphi 0, %s141
      %s142 = sphi 0, %s139
      %s143 = sphi 0, %s142
      %s159 = sphi 0, %s143
    $region4: #{tpu_custom_call.1} parent=1 // loop_header_branch
      %22 = sbr.rel (%p20) target = $region8
    $region5: #{tpu_custom_call.1} parent=1 // loop_body
      %s24 = ssub.s32 %s19, 1
      %s25 = ssub.s32 %s19, 2
      %s26 = sadd.s32 %s19, 1
      %s27 = ssub.s32 %s19, %s26
      %p28 = scmp.eq.s32.totalorder %s27, 0
      %s30 = sadd.s32 %s29, 1
      %s31 = scalar_select %p28, %s29, %s30
      %p34 = pneg %p28
      %p35 = scmp.eq.s32.totalorder %s19, 1
      %p36 = por %p34, %p35
      %p37 = scmp.ne.s32.totalorder %s29, %s32
      %p38 = scmp.eq.s32.totalorder %s19, 0
      %p39 = por %p37, %p38
      %p40 = scmp.ne.s32.totalorder %s29, %s32
      %p41 = scmp.eq.s32.totalorder %s24, 1
      %p42 = por %p40, %p41
      %p43 = scmp.ne.s32.totalorder %s32, %s33
      %p44 = scmp.eq.s32.totalorder %s24, 0
      %p45 = por %p43, %p44
      %p46 = scmp.ne.s32.totalorder %s32, %s33
      %p47 = scmp.eq.s32.totalorder %s25, 1
      %p48 = por %p46, %p47
      %p50 = scmp.ne.s32.totalorder %s33, %s49
      %p51 = scmp.eq.s32.totalorder %s25, 0
      %p52 = por %p50, %p51
      %s54 = sadd.s32 %s53, 1
      %p57 = scmp.eq.s32.totalorder %s19, 1
      %p58 = scmp.ne.s32.totalorder %s53, %s55
      %p59 = scmp.eq.s32.totalorder %s19, 0
      %p60 = por %p58, %p59
      %p61 = scmp.ne.s32.totalorder %s53, %s55
      %p62 = scmp.eq.s32.totalorder %s24, 1
      %p63 = por %p61, %p62
      %p64 = scmp.ne.s32.totalorder %s55, %s56
      %p65 = scmp.eq.s32.totalorder %s24, 0
      %p66 = por %p64, %p65
      %p67 = scmp.ne.s32.totalorder %s55, %s56
      %p68 = scmp.eq.s32.totalorder %s25, 1
      %p69 = por %p67, %p68
      %p71 = scmp.ne.s32.totalorder %s56, %s70
      %p72 = scmp.eq.s32.totalorder %s25, 0
      %p73 = por %p71, %p72
      %s75 = sadd.s32 %s74, 1
      %p78 = scmp.eq.s32.totalorder %s19, 1
      %p79 = scmp.ne.s32.totalorder %s74, %s76
      %p80 = scmp.eq.s32.totalorder %s19, 0
      %p81 = por %p79, %p80
      %p82 = scmp.ne.s32.totalorder %s74, %s76
      %p83 = scmp.eq.s32.totalorder %s24, 1
      %p84 = por %p82, %p83
      %p85 = scmp.ne.s32.totalorder %s76, %s77
      %p86 = scmp.eq.s32.totalorder %s24, 0
      %p87 = por %p85, %p86
      %p88 = scmp.ne.s32.totalorder %s76, %s77
      %p89 = scmp.eq.s32.totalorder %s25, 1
      %p90 = por %p88, %p89
      %p92 = scmp.ne.s32.totalorder %s77, %s91
      %p93 = scmp.eq.s32.totalorder %s25, 0
      %p94 = por %p92, %p93
      %s96 = sadd.s32 %s95, 1
      %p99 = scmp.eq.s32.totalorder %s19, 1
      %p100 = scmp.ne.s32.totalorder %s95, %s97
      %p101 = scmp.eq.s32.totalorder %s19, 0
      %p102 = por %p100, %p101
      %p103 = scmp.ne.s32.totalorder %s95, %s97
      %p104 = scmp.eq.s32.totalorder %s24, 1
      %p105 = por %p103, %p104
      %p106 = scmp.ne.s32.totalorder %s97, %s98
      %p107 = scmp.eq.s32.totalorder %s24, 0
      %p108 = por %p106, %p107
      %p109 = scmp.ne.s32.totalorder %s97, %s98
      %p110 = scmp.eq.s32.totalorder %s25, 1
      %p111 = por %p109, %p110
      %p113 = scmp.ne.s32.totalorder %s98, %s112
      %p114 = scmp.eq.s32.totalorder %s25, 0
      %p115 = por %p113, %p114
      %s117 = sadd.s32 %s116, 1
      %p120 = scmp.eq.s32.totalorder %s19, 1
      %p121 = scmp.ne.s32.totalorder %s116, %s118
      %p122 = scmp.eq.s32.totalorder %s19, 0
      %p123 = por %p121, %p122
      %p124 = scmp.ne.s32.totalorder %s116, %s118
      %p125 = scmp.eq.s32.totalorder %s24, 1
      %p126 = por %p124, %p125
      %p127 = scmp.ne.s32.totalorder %s118, %s119
      %p128 = scmp.eq.s32.totalorder %s24, 0
      %p129 = por %p127, %p128
      %p130 = scmp.ne.s32.totalorder %s118, %s119
      %p131 = scmp.eq.s32.totalorder %s25, 1
      %p132 = por %p130, %p131
      %p134 = scmp.ne.s32.totalorder %s119, %s133
      %p135 = scmp.eq.s32.totalorder %s25, 0
      %p136 = por %p134, %p135
      %s137 = ssub.s32 %s19, %s26
      %p138 = scmp.eq.s32.totalorder %s137, 0
      %s140 = sadd.s32 %s139, 1
      %s141 = scalar_select %p138, %s139, %s140
      %p144 = pneg %p138
      %p145 = scmp.eq.s32.totalorder %s19, 1
      %p146 = por %p144, %p145
      %p147 = scmp.ne.s32.totalorder %s139, %s142
      %p148 = scmp.eq.s32.totalorder %s19, 0
      %p149 = por %p147, %p148
      %p150 = scmp.ne.s32.totalorder %s139, %s142
      %p151 = scmp.eq.s32.totalorder %s24, 1
      %p152 = por %p150, %p151
      %p153 = scmp.ne.s32.totalorder %s142, %s143
      %p154 = scmp.eq.s32.totalorder %s24, 0
      %p155 = por %p153, %p154
      %p156 = scmp.ne.s32.totalorder %s142, %s143
      %p157 = scmp.eq.s32.totalorder %s25, 1
      %p158 = por %p156, %p157
      %p160 = scmp.ne.s32.totalorder %s143, %s159
      %p161 = scmp.eq.s32.totalorder %s25, 0
      %p162 = por %p160, %p161
      %p163 = scmp.le.s32.totalorder 1, %s19
      %p164 = scmp.lt.s32.totalorder %s19, 3
      %p165 = pnand %p163, %p164
      %p166 = pneg %p165
      // Predicated region
      $region9: #{tpu_custom_call.1} parent=5 // pred_check
        _
      $region10: #{tpu_custom_call.1} parent=5 // pred_check_branch
        %168 = sbr.rel (%p165) target = $region12
      $region11: #{tpu_custom_call.1} parent=5 // pred_region
        %s169 = ssub.s32 %s19, 1
        // Predicated region
        $region13: #{tpu_custom_call.1} parent=11 // pred_check
          %p170 = pneg %p66
        $region14: #{tpu_custom_call.1} parent=11 // pred_check_branch
          %172 = sbr.rel (%p170) target = $region16
        $region15: #{tpu_custom_call.1} parent=11 // pred_region
          %s174 = ssub.s32 6272, 6272
          %175 = vsyncadd [#allocation6], %s174
          %s176 = sshll.u32 [#allocation5], 4
          %s177 = int_to_ptr.vmem [resolvable:$true] %s176
          %182 = dma.hbm_to_vmem [thread:$0]  %s1, 6272, %s177, [#allocation6], 64, 64, 4
        $region16: #{tpu_custom_call.1} parent=11 // pred_fallthru
          _
        // Predicated region
        $region17: #{tpu_custom_call.1} parent=11 // pred_check
          %p183 = pneg %p87
        $region18: #{tpu_custom_call.1} parent=11 // pred_check_branch
          %185 = sbr.rel (%p183) target = $region20
        $region19: #{tpu_custom_call.1} parent=11 // pred_region
          %s187 = ssub.s32 16, 16
          %188 = vsyncadd [#allocation6], %s187
          %s190 = sshll.u32 [#allocation7], 4
          %s191 = int_to_ptr.vmem [resolvable:$true] %s190
          %193 = dma.hbm_to_vmem [thread:$0]  %s2, 16, %s191, [#allocation6]
        $region20: #{tpu_custom_call.1} parent=11 // pred_fallthru
          _
        // Predicated region
        $region21: #{tpu_custom_call.1} parent=11 // pred_check
          %p194 = pneg %p108
        $region22: #{tpu_custom_call.1} parent=11 // pred_check_branch
          %196 = sbr.rel (%p194) target = $region24
        $region23: #{tpu_custom_call.1} parent=11 // pred_region
          %s198 = ssub.s32 1024, 1024
          %199 = vsyncadd [#allocation9], %s198
          %s200 = sshll.u32 [#allocation8], 4
          %s201 = int_to_ptr.vmem [resolvable:$true] %s200
          %206 = dma.hbm_to_vmem [thread:$0]  %s3, 1024, %s201, [#allocation9], 64, 64, 4
        $region24: #{tpu_custom_call.1} parent=11 // pred_fallthru
          _
        // Predicated region
        $region25: #{tpu_custom_call.1} parent=11 // pred_check
          %p207 = pneg %p129
        $region26: #{tpu_custom_call.1} parent=11 // pred_check_branch
          %209 = sbr.rel (%p207) target = $region28
        $region27: #{tpu_custom_call.1} parent=11 // pred_region
          %s211 = ssub.s32 16, 16
          %212 = vsyncadd [#allocation9], %s211
          %s214 = sshll.u32 [#allocation10], 4
          %s215 = int_to_ptr.vmem [resolvable:$true] %s214
          %217 = dma.hbm_to_vmem [thread:$0]  %s4, 16, %s215, [#allocation9]
        $region28: #{tpu_custom_call.1} parent=11 // pred_fallthru
          _
      $region12: #{tpu_custom_call.1} parent=5 // pred_fallthru
        _
      %p218 = scmp.lt.s32.totalorder %s19, 2
      // Predicated region
      $region29: #{tpu_custom_call.1} parent=5 // pred_check
        %p219 = pneg %p218
      $region30: #{tpu_custom_call.1} parent=5 // pred_check_branch
        %221 = sbr.rel (%p219) target = $region32
      $region31: #{tpu_custom_call.1} parent=5 // pred_region
        // Predicated region
        $region33: #{tpu_custom_call.1} parent=31 // pred_check
          %p222 = pneg %p39
        $region34: #{tpu_custom_call.1} parent=31 // pred_check_branch
          %224 = sbr.rel (%p222) target = $region36
        $region35: #{tpu_custom_call.1} parent=31 // pred_region
          %s225 = sand.u32 %s29, 1
          %s226 = scalar_lea.sflag [#allocation3], %s225
          %s227 = sand.u32 %s29, 1
          %s228 = smul.addr %s227, 1064
          %s229 = scalar_lea.vmem [#allocation2], %s228
          %s230 = smul.u32 19, %s19
          %s232 = ssub.s32 17024, 17024
          %233 = vsyncadd %s226, %s232
          %s234 = smul.addr %s230, 7
          %s235 = smul.addr %s234, 128
          %s236 = scalar_lea.hbm %s0, %s235
          %s237 = sshll.u32 %s229, 4
          %s238 = int_to_ptr.vmem [resolvable:$true] %s237
          %243 = dma.hbm_to_vmem [thread:$0]  %s236, 17024, %s238, %s226, 896, 896, 56
        $region36: #{tpu_custom_call.1} parent=31 // pred_fallthru
          _
      $region32: #{tpu_custom_call.1} parent=5 // pred_fallthru
        _
      %p244 = scmp.le.s32.totalorder 1, %s19
      %p245 = scmp.lt.s32.totalorder %s19, 3
      %p246 = pnand %p244, %p245
      %p247 = pneg %p246
      // Predicated region
      $region37: #{tpu_custom_call.1} parent=5 // pred_check
        _
      $region38: #{tpu_custom_call.1} parent=5 // pred_check_branch
        %249 = sbr.rel (%p246) target = $region40
      $region39: #{tpu_custom_call.1} parent=5 // pred_region
        %s250 = ssub.s32 %s19, 1
        %s251 = sand.u32 %s32, 1
        %s252 = scalar_lea.sflag [#allocation3], %s251
        %s253 = sand.u32 %s32, 1
        %s254 = smul.addr %s253, 1064
        %s255 = scalar_lea.vmem [#allocation2], %s254
        // Predicated region
        $region41: #{tpu_custom_call.1} parent=39 // pred_check
          %p256 = pneg %p45
        $region42: #{tpu_custom_call.1} parent=39 // pred_check_branch
          %258 = sbr.rel (%p256) target = $region44
        $region43: #{tpu_custom_call.1} parent=39 // pred_region
          %259 = dma.done %s252, 17024
        $region44: #{tpu_custom_call.1} parent=39 // pred_fallthru
          _
        // Predicated region
        $region45: #{tpu_custom_call.1} parent=39 // pred_check
          %p260 = pneg %p66
        $region46: #{tpu_custom_call.1} parent=39 // pred_check_branch
          %262 = sbr.rel (%p260) target = $region48
        $region47: #{tpu_custom_call.1} parent=39 // pred_region
          %263 = dma.done [#allocation6], 6272
        $region48: #{tpu_custom_call.1} parent=39 // pred_fallthru
          _
        // Predicated region
        $region49: #{tpu_custom_call.1} parent=39 // pred_check
          %p264 = pneg %p87
        $region50: #{tpu_custom_call.1} parent=39 // pred_check_branch
          %266 = sbr.rel (%p264) target = $region52
        $region51: #{tpu_custom_call.1} parent=39 // pred_region
          %267 = dma.done [#allocation6], 16
        $region52: #{tpu_custom_call.1} parent=39 // pred_fallthru
          _
        // Predicated region
        $region53: #{tpu_custom_call.1} parent=39 // pred_check
          %p268 = pneg %p108
        $region54: #{tpu_custom_call.1} parent=39 // pred_check_branch
          %270 = sbr.rel (%p268) target = $region56
        $region55: #{tpu_custom_call.1} parent=39 // pred_region
          %271 = dma.done [#allocation9], 1024
        $region56: #{tpu_custom_call.1} parent=39 // pred_fallthru
          _
        // Predicated region
        $region57: #{tpu_custom_call.1} parent=39 // pred_check
          %p272 = pneg %p129
        $region58: #{tpu_custom_call.1} parent=39 // pred_check_branch
          %274 = sbr.rel (%p272) target = $region60
        $region59: #{tpu_custom_call.1} parent=39 // pred_region
          %275 = dma.done [#allocation9], 16
        $region60: #{tpu_custom_call.1} parent=39 // pred_fallthru
          _
        %s276 = sand.u32 %s32, 1
        %s277 = scalar_lea.sflag [#allocation3], %s276
        %s278 = sand.u32 %s32, 1
        %s279 = smul.addr %s278, 1064
        %s280 = scalar_lea.vmem [#allocation2], %s279
        %p281 = pneg %p45
        %p282 = pneg %p42
        %p283 = pneg %p66
        %p284 = pneg %p63
        %p285 = pneg %p87
        %p286 = pneg %p84
        %p287 = pneg %p108
        %p288 = pneg %p105
        %p289 = pneg %p129
        %p290 = pneg %p126
        %p291 = pneg %p155
        %p292 = pneg %p152
        %s293 = sand.u32 %s142, 1
        %s294 = scalar_lea.sflag [#allocation4], %s293
        %s295 = sand.u32 %s142, 1
        %s296 = smul.addr %s295, 76
        %s297 = scalar_lea.vmem [#allocation11], %s296
        %s298 = smul.u32 19, %s24
        %s299 = smul.u32 19, %s24
        %v301 = vld [vmem:[%s255] sm:$0xff]
        %v302 = vld [vmem:[%s255 + $0x8] sm:$0xff]
        %v303 = vld [vmem:[%s255 + $0x10] sm:$0xff]
        %v304 = vld [vmem:[%s255 + $0x18] sm:$0xff]
        %v305 = vld [vmem:[%s255 + $0x20] sm:$0xff]
        %v306 = vld [vmem:[%s255 + $0x28] sm:$0xff]
        %v307 = vld [vmem:[%s255 + $0x30] sm:$0xff]
        %v308 = vld [vmem:[%s255 + $0x38] sm:$0xff]
        %v309 = vld [vmem:[%s255 + $0x40] sm:$0xff]
        %v310 = vld [vmem:[%s255 + $0x48] sm:$0xff]
        %v311 = vld [vmem:[%s255 + $0x50] sm:$0xff]
        %v312 = vld [vmem:[%s255 + $0x58] sm:$0xff]
        %v313 = vld [vmem:[%s255 + $0x60] sm:$0xff]
        %v314 = vld [vmem:[%s255 + $0x68] sm:$0xff]
        %v315 = vld [vmem:[%s255 + $0x70] sm:$0xff]
        %v316 = vld [vmem:[%s255 + $0x78] sm:$0xff]
        %v317 = vld [vmem:[%s255 + $0x80] sm:$0xff]
        %v318 = vld [vmem:[%s255 + $0x88] sm:$0xff]
        %v319 = vld [vmem:[%s255 + $0x90] sm:$0xff]
        %v320 = vld [vmem:[%s255 + $0x98] sm:$0xff]
        %v321 = vld [vmem:[%s255 + $0xa0] sm:$0xff]
        %v322 = vld [vmem:[%s255 + $0xa8] sm:$0xff]
        %v323 = vld [vmem:[%s255 + $0xb0] sm:$0xff]
        %v324 = vld [vmem:[%s255 + $0xb8] sm:$0xff]
        %v325 = vld [vmem:[%s255 + $0xc0] sm:$0xff]
        %v326 = vld [vmem:[%s255 + $0xc8] sm:$0xff]
        %v327 = vld [vmem:[%s255 + $0xd0] sm:$0xff]
        %v328 = vld [vmem:[%s255 + $0xd8] sm:$0xff]
        %v329 = vld [vmem:[%s255 + $0xe0] sm:$0xff]
        %v330 = vld [vmem:[%s255 + $0xe8] sm:$0xff]
        %v331 = vld [vmem:[%s255 + $0xf0] sm:$0xff]
        %v332 = vld [vmem:[%s255 + $0xf8] sm:$0xff]
        %v333 = vld [vmem:[%s255 + $0x100] sm:$0xff]
        %v334 = vld [vmem:[%s255 + $0x108] sm:$0xff]
        %v335 = vld [vmem:[%s255 + $0x110] sm:$0xff]
        %v336 = vld [vmem:[%s255 + $0x118] sm:$0xff]
        %v337 = vld [vmem:[%s255 + $0x120] sm:$0xff]
        %v338 = vld [vmem:[%s255 + $0x128] sm:$0xff]
        %v339 = vld [vmem:[%s255 + $0x130] sm:$0xff]
        %v340 = vld [vmem:[%s255 + $0x138] sm:$0xff]
        %v341 = vld [vmem:[%s255 + $0x140] sm:$0xff]
        %v342 = vld [vmem:[%s255 + $0x148] sm:$0xff]
        %v343 = vld [vmem:[%s255 + $0x150] sm:$0xff]
        %v344 = vld [vmem:[%s255 + $0x158] sm:$0xff]
        %v345 = vld [vmem:[%s255 + $0x160] sm:$0xff]
        %v346 = vld [vmem:[%s255 + $0x168] sm:$0xff]
        %v347 = vld [vmem:[%s255 + $0x170] sm:$0xff]
        %v348 = vld [vmem:[%s255 + $0x178] sm:$0xff]
        %v349 = vld [vmem:[%s255 + $0x180] sm:$0xff]
        %v350 = vld [vmem:[%s255 + $0x188] sm:$0xff]
        %v351 = vld [vmem:[%s255 + $0x190] sm:$0xff]
        %v352 = vld [vmem:[%s255 + $0x198] sm:$0xff]
        %v353 = vld [vmem:[%s255 + $0x1a0] sm:$0xff]
        %v354 = vld [vmem:[%s255 + $0x1a8] sm:$0xff]
        %v355 = vld [vmem:[%s255 + $0x1b0] sm:$0xff]
        %v356 = vld [vmem:[%s255 + $0x1b8] sm:$0xff]
        %v357 = vld [vmem:[%s255 + $0x1c0] sm:$0xff]
        %v358 = vld [vmem:[%s255 + $0x1c8] sm:$0xff]
        %v359 = vld [vmem:[%s255 + $0x1d0] sm:$0xff]
        %v360 = vld [vmem:[%s255 + $0x1d8] sm:$0xff]
        %v361 = vld [vmem:[%s255 + $0x1e0] sm:$0xff]
        %v362 = vld [vmem:[%s255 + $0x1e8] sm:$0xff]
        %v363 = vld [vmem:[%s255 + $0x1f0] sm:$0xff]
        %v364 = vld [vmem:[%s255 + $0x1f8] sm:$0xff]
        %v365 = vld [vmem:[%s255 + $0x200] sm:$0xff]
        %v366 = vld [vmem:[%s255 + $0x208] sm:$0xff]
        %v367 = vld [vmem:[%s255 + $0x210] sm:$0xff]
        %v368 = vld [vmem:[%s255 + $0x218] sm:$0xff]
        %v369 = vld [vmem:[%s255 + $0x220] sm:$0xff]
        %v370 = vld [vmem:[%s255 + $0x228] sm:$0xff]
        %v371 = vld [vmem:[%s255 + $0x230] sm:$0xff]
        %v372 = vld [vmem:[%s255 + $0x238] sm:$0xff]
        %v373 = vld [vmem:[%s255 + $0x240] sm:$0xff]
        %v374 = vld [vmem:[%s255 + $0x248] sm:$0xff]
        %v375 = vld [vmem:[%s255 + $0x250] sm:$0xff]
        %v376 = vld [vmem:[%s255 + $0x258] sm:$0xff]
        %v377 = vld [vmem:[%s255 + $0x260] sm:$0xff]
        %v378 = vld [vmem:[%s255 + $0x268] sm:$0xff]
        %v379 = vld [vmem:[%s255 + $0x270] sm:$0xff]
        %v380 = vld [vmem:[%s255 + $0x278] sm:$0xff]
        %v381 = vld [vmem:[%s255 + $0x280] sm:$0xff]
        %v382 = vld [vmem:[%s255 + $0x288] sm:$0xff]
        %v383 = vld [vmem:[%s255 + $0x290] sm:$0xff]
        %v384 = vld [vmem:[%s255 + $0x298] sm:$0xff]
        %v385 = vld [vmem:[%s255 + $0x2a0] sm:$0xff]
        %v386 = vld [vmem:[%s255 + $0x2a8] sm:$0xff]
        %v387 = vld [vmem:[%s255 + $0x2b0] sm:$0xff]
        %v388 = vld [vmem:[%s255 + $0x2b8] sm:$0xff]
        %v389 = vld [vmem:[%s255 + $0x2c0] sm:$0xff]
        %v390 = vld [vmem:[%s255 + $0x2c8] sm:$0xff]
        %v391 = vld [vmem:[%s255 + $0x2d0] sm:$0xff]
        %v392 = vld [vmem:[%s255 + $0x2d8] sm:$0xff]
        %v393 = vld [vmem:[%s255 + $0x2e0] sm:$0xff]
        %v394 = vld [vmem:[%s255 + $0x2e8] sm:$0xff]
        %v395 = vld [vmem:[%s255 + $0x2f0] sm:$0xff]
        %v396 = vld [vmem:[%s255 + $0x2f8] sm:$0xff]
        %v397 = vld [vmem:[%s255 + $0x300] sm:$0xff]
        %v398 = vld [vmem:[%s255 + $0x308] sm:$0xff]
        %v399 = vld [vmem:[%s255 + $0x310] sm:$0xff]
        %v400 = vld [vmem:[%s255 + $0x318] sm:$0xff]
        %v401 = vld [vmem:[%s255 + $0x320] sm:$0xff]
        %v402 = vld [vmem:[%s255 + $0x328] sm:$0xff]
        %v403 = vld [vmem:[%s255 + $0x330] sm:$0xff]
        %v404 = vld [vmem:[%s255 + $0x338] sm:$0xff]
        %v405 = vld [vmem:[%s255 + $0x340] sm:$0xff]
        %v406 = vld [vmem:[%s255 + $0x348] sm:$0xff]
        %v407 = vld [vmem:[%s255 + $0x350] sm:$0xff]
        %v408 = vld [vmem:[%s255 + $0x358] sm:$0xff]
        %v409 = vld [vmem:[%s255 + $0x360] sm:$0xff]
        %v410 = vld [vmem:[%s255 + $0x368] sm:$0xff]
        %v411 = vld [vmem:[%s255 + $0x370] sm:$0xff]
        %v412 = vld [vmem:[%s255 + $0x378] sm:$0xff]
        %v413 = vld [vmem:[%s255 + $0x380] sm:$0xff]
        %v414 = vld [vmem:[%s255 + $0x388] sm:$0xff]
        %v415 = vld [vmem:[%s255 + $0x390] sm:$0xff]
        %v416 = vld [vmem:[%s255 + $0x398] sm:$0xff]
        %v417 = vld [vmem:[%s255 + $0x3a0] sm:$0xff]
        %v418 = vld [vmem:[%s255 + $0x3a8] sm:$0xff]
        %v419 = vld [vmem:[%s255 + $0x3b0] sm:$0xff]
        %v420 = vld [vmem:[%s255 + $0x3b8] sm:$0xff]
        %v421 = vld [vmem:[%s255 + $0x3c0] sm:$0xff]
        %v422 = vld [vmem:[%s255 + $0x3c8] sm:$0xff]
        %v423 = vld [vmem:[%s255 + $0x3d0] sm:$0xff]
        %v424 = vld [vmem:[%s255 + $0x3d8] sm:$0xff]
        %v425 = vld [vmem:[%s255 + $0x3e0] sm:$0xff]
        %v426 = vld [vmem:[%s255 + $0x3e8] sm:$0xff]
        %v427 = vld [vmem:[%s255 + $0x3f0] sm:$0xff]
        %v428 = vld [vmem:[%s255 + $0x3f8] sm:$0xff]
        %v429 = vld [vmem:[%s255 + $0x400] sm:$0xff]
        %v430 = vld [vmem:[%s255 + $0x408] sm:$0xff]
        %v431 = vld [vmem:[%s255 + $0x410] sm:$0xff]
        %v432 = vld [vmem:[%s255 + $0x418] sm:$0xff]
        %v433 = vld [vmem:[%s255 + $0x420] sm:$0xff]
        %v434 = vpack.c.bf16 %v308, %v301
        %v435 = vpack.c.bf16 %v309, %v302
        %v436 = vpack.c.bf16 %v310, %v303
        %v437 = vpack.c.bf16 %v311, %v304
        %v438 = vpack.c.bf16 %v312, %v305
        %v439 = vpack.c.bf16 %v313, %v306
        %v440 = vpack.c.bf16 %v314, %v307
        %v441 = vpack.c.bf16 %v322, %v315
        %v442 = vpack.c.bf16 %v323, %v316
        %v443 = vpack.c.bf16 %v324, %v317
        %v444 = vpack.c.bf16 %v325, %v318
        %v445 = vpack.c.bf16 %v326, %v319
        %v446 = vpack.c.bf16 %v327, %v320
        %v447 = vpack.c.bf16 %v328, %v321
        %v448 = vpack.c.bf16 %v336, %v329
        %v449 = vpack.c.bf16 %v337, %v330
        %v450 = vpack.c.bf16 %v338, %v331
        %v451 = vpack.c.bf16 %v339, %v332
        %v452 = vpack.c.bf16 %v340, %v333
        %v453 = vpack.c.bf16 %v341, %v334
        %v454 = vpack.c.bf16 %v342, %v335
        %v455 = vpack.c.bf16 %v350, %v343
        %v456 = vpack.c.bf16 %v351, %v344
        %v457 = vpack.c.bf16 %v352, %v345
        %v458 = vpack.c.bf16 %v353, %v346
        %v459 = vpack.c.bf16 %v354, %v347
        %v460 = vpack.c.bf16 %v355, %v348
        %v461 = vpack.c.bf16 %v356, %v349
        %v462 = vpack.c.bf16 %v364, %v357
        %v463 = vpack.c.bf16 %v365, %v358
        %v464 = vpack.c.bf16 %v366, %v359
        %v465 = vpack.c.bf16 %v367, %v360
        %v466 = vpack.c.bf16 %v368, %v361
        %v467 = vpack.c.bf16 %v369, %v362
        %v468 = vpack.c.bf16 %v370, %v363
        %v469 = vpack.c.bf16 %v378, %v371
        %v470 = vpack.c.bf16 %v379, %v372
        %v471 = vpack.c.bf16 %v380, %v373
        %v472 = vpack.c.bf16 %v381, %v374
        %v473 = vpack.c.bf16 %v382, %v375
        %v474 = vpack.c.bf16 %v383, %v376
        %v475 = vpack.c.bf16 %v384, %v377
        %v476 = vpack.c.bf16 %v392, %v385
        %v477 = vpack.c.bf16 %v393, %v386
        %v478 = vpack.c.bf16 %v394, %v387
        %v479 = vpack.c.bf16 %v395, %v388
        %v480 = vpack.c.bf16 %v396, %v389
        %v481 = vpack.c.bf16 %v397, %v390
        %v482 = vpack.c.bf16 %v398, %v391
        %v483 = vpack.c.bf16 %v406, %v399
        %v484 = vpack.c.bf16 %v407, %v400
        %v485 = vpack.c.bf16 %v408, %v401
        %v486 = vpack.c.bf16 %v409, %v402
        %v487 = vpack.c.bf16 %v410, %v403
        %v488 = vpack.c.bf16 %v411, %v404
        %v489 = vpack.c.bf16 %v412, %v405
        %v490 = vpack.c.bf16 %v420, %v413
        %v491 = vpack.c.bf16 %v421, %v414
        %v492 = vpack.c.bf16 %v422, %v415
        %v493 = vpack.c.bf16 %v423, %v416
        %v494 = vpack.c.bf16 %v424, %v417
        %v495 = vpack.c.bf16 %v425, %v418
        %v496 = vpack.c.bf16 %v426, %v419
        %v497 = vpack.c.bf16 %v427, %v427
        %v498 = vpack.c.bf16 %v428, %v428
        %v499 = vpack.c.bf16 %v429, %v429
        %v500 = vpack.c.bf16 %v430, %v430
        %v501 = vpack.c.bf16 %v431, %v431
        %v502 = vpack.c.bf16 %v432, %v432
        %v503 = vpack.c.bf16 %v433, %v433
        %v504 = vld [vmem:[#allocation5] sm:$0xf]
        %v505 = vld [vmem:[#allocation5 + $0x4] sm:$0xf]
        %v506 = vld [vmem:[#allocation5 + $0x8] sm:$0xf]
        %v507 = vld [vmem:[#allocation5 + $0xc] sm:$0xf]
        %v508 = vld [vmem:[#allocation5 + $0x10] sm:$0xf]
        %v509 = vld [vmem:[#allocation5 + $0x14] sm:$0xf]
        %v510 = vld [vmem:[#allocation5 + $0x18] sm:$0xf]
        %v511 = vld [vmem:[#allocation5 + $0x1c] sm:$0xf]
        %v512 = vld [vmem:[#allocation5 + $0x20] sm:$0xf]
        %v513 = vld [vmem:[#allocation5 + $0x24] sm:$0xf]
        %v514 = vld [vmem:[#allocation5 + $0x28] sm:$0xf]
        %v515 = vld [vmem:[#allocation5 + $0x2c] sm:$0xf]
        %v516 = vld [vmem:[#allocation5 + $0x30] sm:$0xf]
        %v517 = vld [vmem:[#allocation5 + $0x34] sm:$0xf]
        %v518 = vld [vmem:[#allocation5 + $0x38] sm:$0xf]
        %v519 = vld [vmem:[#allocation5 + $0x3c] sm:$0xf]
        %v520 = vld [vmem:[#allocation5 + $0x40] sm:$0xf]
        %v521 = vld [vmem:[#allocation5 + $0x44] sm:$0xf]
        %v522 = vld [vmem:[#allocation5 + $0x48] sm:$0xf]
        %v523 = vld [vmem:[#allocation5 + $0x4c] sm:$0xf]
        %v524 = vld [vmem:[#allocation5 + $0x50] sm:$0xf]
        %v525 = vld [vmem:[#allocation5 + $0x54] sm:$0xf]
        %v526 = vld [vmem:[#allocation5 + $0x58] sm:$0xf]
        %v527 = vld [vmem:[#allocation5 + $0x5c] sm:$0xf]
        %v528 = vld [vmem:[#allocation5 + $0x60] sm:$0xf]
        %v529 = vld [vmem:[#allocation5 + $0x64] sm:$0xf]
        %v530 = vld [vmem:[#allocation5 + $0x68] sm:$0xf]
        %v531 = vld [vmem:[#allocation5 + $0x6c] sm:$0xf]
        %v532 = vld [vmem:[#allocation5 + $0x70] sm:$0xf]
        %v533 = vld [vmem:[#allocation5 + $0x74] sm:$0xf]
        %v534 = vld [vmem:[#allocation5 + $0x78] sm:$0xf]
        %v535 = vld [vmem:[#allocation5 + $0x7c] sm:$0xf]
        %v536 = vld [vmem:[#allocation5 + $0x80] sm:$0xf]
        %v537 = vld [vmem:[#allocation5 + $0x84] sm:$0xf]
        %v538 = vld [vmem:[#allocation5 + $0x88] sm:$0xf]
        %v539 = vld [vmem:[#allocation5 + $0x8c] sm:$0xf]
        %v540 = vld [vmem:[#allocation5 + $0x90] sm:$0xf]
        %v541 = vld [vmem:[#allocation5 + $0x94] sm:$0xf]
        %v542 = vld [vmem:[#allocation5 + $0x98] sm:$0xf]
        %v543 = vld [vmem:[#allocation5 + $0x9c] sm:$0xf]
        %v544 = vld [vmem:[#allocation5 + $0xa0] sm:$0xf]
        %v545 = vld [vmem:[#allocation5 + $0xa4] sm:$0xf]
        %v546 = vld [vmem:[#allocation5 + $0xa8] sm:$0xf]
        %v547 = vld [vmem:[#allocation5 + $0xac] sm:$0xf]
        %v548 = vld [vmem:[#allocation5 + $0xb0] sm:$0xf]
        %v549 = vld [vmem:[#allocation5 + $0xb4] sm:$0xf]
        %v550 = vld [vmem:[#allocation5 + $0xb8] sm:$0xf]
        %v551 = vld [vmem:[#allocation5 + $0xbc] sm:$0xf]
        %v552 = vld [vmem:[#allocation5 + $0xc0] sm:$0xf]
        %v553 = vld [vmem:[#allocation5 + $0xc4] sm:$0xf]
        %v554 = vld [vmem:[#allocation5 + $0xc8] sm:$0xf]
        %v555 = vld [vmem:[#allocation5 + $0xcc] sm:$0xf]
        %v556 = vld [vmem:[#allocation5 + $0xd0] sm:$0xf]
        %v557 = vld [vmem:[#allocation5 + $0xd4] sm:$0xf]
        %v558 = vld [vmem:[#allocation5 + $0xd8] sm:$0xf]
        %v559 = vld [vmem:[#allocation5 + $0xdc] sm:$0xf]
        %v560 = vld [vmem:[#allocation5 + $0xe0] sm:$0xf]
        %v561 = vld [vmem:[#allocation5 + $0xe4] sm:$0xf]
        %v562 = vld [vmem:[#allocation5 + $0xe8] sm:$0xf]
        %v563 = vld [vmem:[#allocation5 + $0xec] sm:$0xf]
        %v564 = vld [vmem:[#allocation5 + $0xf0] sm:$0xf]
        %v565 = vld [vmem:[#allocation5 + $0xf4] sm:$0xf]
        %v566 = vld [vmem:[#allocation5 + $0xf8] sm:$0xf]
        %v567 = vld [vmem:[#allocation5 + $0xfc] sm:$0xf]
        %v568 = vld [vmem:[#allocation5 + $0x100] sm:$0xf]
        %v569 = vld [vmem:[#allocation5 + $0x104] sm:$0xf]
        %v570 = vld [vmem:[#allocation5 + $0x108] sm:$0xf]
        %v571 = vld [vmem:[#allocation5 + $0x10c] sm:$0xf]
        %v572 = vld [vmem:[#allocation5 + $0x110] sm:$0xf]
        %v573 = vld [vmem:[#allocation5 + $0x114] sm:$0xf]
        %v574 = vld [vmem:[#allocation5 + $0x118] sm:$0xf]
        %v575 = vld [vmem:[#allocation5 + $0x11c] sm:$0xf]
        %v576 = vld [vmem:[#allocation5 + $0x120] sm:$0xf]
        %v577 = vld [vmem:[#allocation5 + $0x124] sm:$0xf]
        %v578 = vld [vmem:[#allocation5 + $0x128] sm:$0xf]
        %v579 = vld [vmem:[#allocation5 + $0x12c] sm:$0xf]
        %v580 = vld [vmem:[#allocation5 + $0x130] sm:$0xf]
        %v581 = vld [vmem:[#allocation5 + $0x134] sm:$0xf]
        %v582 = vld [vmem:[#allocation5 + $0x138] sm:$0xf]
        %v583 = vld [vmem:[#allocation5 + $0x13c] sm:$0xf]
        %v584 = vld [vmem:[#allocation5 + $0x140] sm:$0xf]
        %v585 = vld [vmem:[#allocation5 + $0x144] sm:$0xf]
        %v586 = vld [vmem:[#allocation5 + $0x148] sm:$0xf]
        %v587 = vld [vmem:[#allocation5 + $0x14c] sm:$0xf]
        %v588 = vld [vmem:[#allocation5 + $0x150] sm:$0xf]
        %v589 = vld [vmem:[#allocation5 + $0x154] sm:$0xf]
        %v590 = vld [vmem:[#allocation5 + $0x158] sm:$0xf]
        %v591 = vld [vmem:[#allocation5 + $0x15c] sm:$0xf]
        %v592 = vld [vmem:[#allocation5 + $0x160] sm:$0xf]
        %v593 = vld [vmem:[#allocation5 + $0x164] sm:$0xf]
        %v594 = vld [vmem:[#allocation5 + $0x168] sm:$0xf]
        %v595 = vld [vmem:[#allocation5 + $0x16c] sm:$0xf]
        %v596 = vld [vmem:[#allocation5 + $0x170] sm:$0xf]
        %v597 = vld [vmem:[#allocation5 + $0x174] sm:$0xf]
        %v598 = vld [vmem:[#allocation5 + $0x178] sm:$0xf]
        %v599 = vld [vmem:[#allocation5 + $0x17c] sm:$0xf]
        %v600 = vld [vmem:[#allocation5 + $0x180] sm:$0xf]
        %v601 = vld [vmem:[#allocation5 + $0x184] sm:$0xf]
        %v602 = vld [vmem:[#allocation7] sm:$0x1]
        %v604 = vlaneseq
        %v605 = vshrl.u32 %v604, 7
        %v606 = vsub.s32 0, %v605
        %v607 = vrot.slane %v602, %v606
        %v707 = vunpack.c.l.b16 %v504
        %v708 = vunpack.c.l.b16 %v505
        %v709 = vunpack.c.l.b16 %v506
        %v710 = vunpack.c.l.b16 %v507
        %v711 = vunpack.c.l.b16 %v508
        %v712 = vunpack.c.l.b16 %v509
        %v713 = vunpack.c.l.b16 %v510
        %v714 = vunpack.c.l.b16 %v511
        %v715 = vunpack.c.l.b16 %v512
        %v716 = vunpack.c.l.b16 %v513
        %v717 = vunpack.c.l.b16 %v514
        %v718 = vunpack.c.l.b16 %v515
        %v719 = vunpack.c.l.b16 %v516
        %v720 = vunpack.c.l.b16 %v517
        %v721 = vunpack.c.l.b16 %v518
        %v722 = vunpack.c.l.b16 %v519
        %v723 = vunpack.c.l.b16 %v520
        %v724 = vunpack.c.l.b16 %v521
        %v725 = vunpack.c.l.b16 %v522
        %v726 = vunpack.c.l.b16 %v523
        %v727 = vunpack.c.l.b16 %v524
        %v728 = vunpack.c.l.b16 %v525
        %v729 = vunpack.c.l.b16 %v526
        %v730 = vunpack.c.l.b16 %v527
        %v731 = vunpack.c.l.b16 %v528
        %v732 = vunpack.c.l.b16 %v529
        %v733 = vunpack.c.l.b16 %v530
        %v734 = vunpack.c.l.b16 %v531
        %v735 = vunpack.c.l.b16 %v532
        %v736 = vunpack.c.l.b16 %v533
        %v737 = vunpack.c.l.b16 %v534
        %v738 = vunpack.c.l.b16 %v535
        %v739 = vunpack.c.l.b16 %v536
        %v740 = vunpack.c.l.b16 %v537
        %v741 = vunpack.c.l.b16 %v538
        %v742 = vunpack.c.l.b16 %v539
        %v743 = vunpack.c.l.b16 %v540
        %v744 = vunpack.c.l.b16 %v541
        %v745 = vunpack.c.l.b16 %v542
        %v746 = vunpack.c.l.b16 %v543
        %v747 = vunpack.c.l.b16 %v544
        %v748 = vunpack.c.l.b16 %v545
        %v749 = vunpack.c.l.b16 %v546
        %v750 = vunpack.c.l.b16 %v547
        %v751 = vunpack.c.l.b16 %v548
        %v752 = vunpack.c.l.b16 %v549
        %v753 = vunpack.c.l.b16 %v550
        %v754 = vunpack.c.l.b16 %v551
        %v755 = vunpack.c.l.b16 %v552
        %v756 = vunpack.c.l.b16 %v553
        %v757 = vunpack.c.l.b16 %v554
        %v758 = vunpack.c.l.b16 %v555
        %v759 = vunpack.c.l.b16 %v556
        %v760 = vunpack.c.l.b16 %v557
        %v761 = vunpack.c.l.b16 %v558
        %v762 = vunpack.c.l.b16 %v559
        %v763 = vunpack.c.l.b16 %v560
        %v764 = vunpack.c.l.b16 %v561
        %v765 = vunpack.c.l.b16 %v562
        %v766 = vunpack.c.l.b16 %v563
        %v767 = vunpack.c.l.b16 %v564
        %v768 = vunpack.c.l.b16 %v565
        %v769 = vunpack.c.l.b16 %v566
        %v770 = vunpack.c.l.b16 %v567
        %v771 = vunpack.c.l.b16 %v568
        %v772 = vunpack.c.l.b16 %v569
        %v773 = vunpack.c.l.b16 %v570
        %v774 = vunpack.c.l.b16 %v571
        %v775 = vunpack.c.l.b16 %v572
        %v776 = vunpack.c.l.b16 %v573
        %v777 = vunpack.c.l.b16 %v574
        %v778 = vunpack.c.l.b16 %v575
        %v779 = vunpack.c.l.b16 %v576
        %v780 = vunpack.c.l.b16 %v577
        %v781 = vunpack.c.l.b16 %v578
        %v782 = vunpack.c.l.b16 %v579
        %v783 = vunpack.c.l.b16 %v580
        %v784 = vunpack.c.l.b16 %v581
        %v785 = vunpack.c.l.b16 %v582
        %v786 = vunpack.c.l.b16 %v583
        %v787 = vunpack.c.l.b16 %v584
        %v788 = vunpack.c.l.b16 %v585
        %v789 = vunpack.c.l.b16 %v586
        %v790 = vunpack.c.l.b16 %v587
        %v791 = vunpack.c.l.b16 %v588
        %v792 = vunpack.c.l.b16 %v589
        %v793 = vunpack.c.l.b16 %v590
        %v794 = vunpack.c.l.b16 %v591
        %v795 = vunpack.c.l.b16 %v592
        %v796 = vunpack.c.l.b16 %v593
        %v797 = vunpack.c.l.b16 %v594
        %v798 = vunpack.c.l.b16 %v595
        %v799 = vunpack.c.l.b16 %v596
        %v800 = vunpack.c.l.b16 %v597
        %v801 = vunpack.c.l.b16 %v598
        %v802 = vunpack.c.l.b16 %v599
        %v803 = vunpack.c.l.b16 %v600
        %v804 = vunpack.c.l.b16 %v601
        %v805 = vpack.c.b16 %v708, %v707
        %v806 = vpack.c.b16 %v710, %v709
        %v807 = vpack.c.b16 %v712, %v711
        %v808 = vpack.c.b16 %v714, %v713
        %v809 = vpack.c.b16 %v716, %v715
        %v810 = vpack.c.b16 %v718, %v717
        %v811 = vpack.c.b16 %v720, %v719
        %v812 = vpack.c.b16 %v722, %v721
        %v813 = vpack.c.b16 %v724, %v723
        %v814 = vpack.c.b16 %v726, %v725
        %v815 = vpack.c.b16 %v728, %v727
        %v816 = vpack.c.b16 %v730, %v729
        %v817 = vpack.c.b16 %v732, %v731
        %v818 = vpack.c.b16 %v734, %v733
        %v819 = vpack.c.b16 %v736, %v735
        %v820 = vpack.c.b16 %v738, %v737
        %v821 = vpack.c.b16 %v740, %v739
        %v822 = vpack.c.b16 %v742, %v741
        %v823 = vpack.c.b16 %v744, %v743
        %v824 = vpack.c.b16 %v746, %v745
        %v825 = vpack.c.b16 %v748, %v747
        %v826 = vpack.c.b16 %v750, %v749
        %v827 = vpack.c.b16 %v752, %v751
        %v828 = vpack.c.b16 %v754, %v753
        %v829 = vpack.c.b16 %v756, %v755
        %v830 = vpack.c.b16 %v758, %v757
        %v831 = vpack.c.b16 %v760, %v759
        %v832 = vpack.c.b16 %v762, %v761
        %v833 = vpack.c.b16 %v764, %v763
        %v834 = vpack.c.b16 %v766, %v765
        %v835 = vpack.c.b16 %v768, %v767
        %v836 = vpack.c.b16 %v770, %v769
        %v837 = vpack.c.b16 %v772, %v771
        %v838 = vpack.c.b16 %v774, %v773
        %v839 = vpack.c.b16 %v776, %v775
        %v840 = vpack.c.b16 %v778, %v777
        %v841 = vpack.c.b16 %v780, %v779
        %v842 = vpack.c.b16 %v782, %v781
        %v843 = vpack.c.b16 %v784, %v783
        %v844 = vpack.c.b16 %v786, %v785
        %v845 = vpack.c.b16 %v788, %v787
        %v846 = vpack.c.b16 %v790, %v789
        %v847 = vpack.c.b16 %v792, %v791
        %v848 = vpack.c.b16 %v794, %v793
        %v849 = vpack.c.b16 %v796, %v795
        %v850 = vpack.c.b16 %v798, %v797
        %v851 = vpack.c.b16 %v800, %v799
        %v852 = vpack.c.b16 %v802, %v801
        %v853 = vpack.c.b16 %v804, %v803
        %vm903 = vcmask 130048
        %v905 = vsel %vm903, %v440, 0
        %v908 = vsel %vm903, %v447, 0
        %v911 = vsel %vm903, %v454, 0
        %v914 = vsel %vm903, %v461, 0
        %v917 = vsel %vm903, %v468, 0
        %v920 = vsel %vm903, %v475, 0
        %v923 = vsel %vm903, %v482, 0
        %v926 = vsel %vm903, %v489, 0
        %v929 = vsel %vm903, %v496, 0
        %v932 = vsel %vm903, %v503, 0
        %934 = vmatprep.subr.bf16.mxu0 0
        %935 = vmatpush1.bf16.msra.mxu0 %v805
        %936 = vmatprep.subr.bf16.mxu0 0
        %937 = vmatpush1.bf16.msra.mxu0 %v806
        %938 = vmatprep.subr.bf16.mxu0 0
        %939 = vmatpush1.bf16.msra.mxu0 %v807
        %940 = vmatprep.subr.bf16.mxu0 0
        %941 = vmatpush1.bf16.msra.mxu0 %v808
        %942 = vmatprep.subr.bf16.mxu0 0
        %943 = vmatpush1.bf16.msra.mxu0 %v809
        %944 = vmatprep.subr.bf16.mxu0 0
        %945 = vmatpush1.bf16.msra.mxu0 %v810
        %946 = vmatprep.subr.bf16.mxu0 0
        %947 = vmatpush1.bf16.msra.mxu0 %v811
        %948 = vmatprep.subr.bf16.mxu0 0
        %949 = vmatpush1.bf16.msra.mxu0 %v812
        %950 = vmatprep.subr.bf16.mxu0 0
        %951 = vmatpush1.bf16.msra.mxu0 %v813
        %952 = vmatprep.subr.bf16.mxu0 0
        %953 = vmatpush1.bf16.msra.mxu0 %v814
        %954 = vmatprep.subr.bf16.mxu0 0
        %955 = vmatpush1.bf16.msra.mxu0 %v815
        %956 = vmatprep.subr.bf16.mxu0 0
        %957 = vmatpush1.bf16.msra.mxu0 %v816
        %958 = vmatprep.subr.bf16.mxu0 0
        %959 = vmatpush1.bf16.msra.mxu0 %v817
        %960 = vmatprep.subr.bf16.mxu0 0
        %961 = vmatpush1.bf16.msra.mxu0 %v818
        %962 = vmatprep.subr.bf16.mxu0 0
        %963 = vmatpush1.bf16.msra.mxu0 %v819
        %964 = vmatprep.subr.bf16.mxu0 0
        %965 = vmatpush1.bf16.msra.mxu0 %v820
        %966 = vmatprep.mubr.bf16.mxu0 %v435
        %967 = vmatmul.mubr.bf16.gmra.mrb[0].mxu0 %v434
        %v968 = vpop.f32.mrb[0].mxu0
        %v969 = vadd.f32 %v607, %v968
        %v970 = vpop.f32.mrb[0].mxu0
        %v971 = vpop.f32.mrb[0].mxu0
        %v972 = vadd.f32 %v607, %v971
        %v973 = vpop.f32.mrb[0].mxu0
        %974 = vmatprep.mubr.bf16.mxu0 %v442
        %975 = vmatmul.mubr.bf16.gmra.mrb[0].mxu0 %v441
        %v976 = vpop.f32.mrb[0].mxu0
        %v977 = vadd.f32 %v607, %v976
        %v978 = vpop.f32.mrb[0].mxu0
        %v979 = vpop.f32.mrb[0].mxu0
        %v980 = vadd.f32 %v607, %v979
        %v981 = vpop.f32.mrb[0].mxu0
        %982 = vmatprep.mubr.bf16.mxu0 %v449
        %983 = vmatmul.mubr.bf16.gmra.mrb[0].mxu0 %v448
        %v984 = vpop.f32.mrb[0].mxu0
        %v985 = vadd.f32 %v607, %v984
        %v986 = vpop.f32.mrb[0].mxu0
        %v987 = vpop.f32.mrb[0].mxu0
        %v988 = vadd.f32 %v607, %v987
        %v989 = vpop.f32.mrb[0].mxu0
        %990 = vmatprep.mubr.bf16.mxu0 %v456
        %991 = vmatmul.mubr.bf16.gmra.mrb[0].mxu0 %v455
        %v992 = vpop.f32.mrb[0].mxu0
        %v993 = vadd.f32 %v607, %v992
        %v994 = vpop.f32.mrb[0].mxu0
        %v995 = vpop.f32.mrb[0].mxu0
        %v996 = vadd.f32 %v607, %v995
        %v997 = vpop.f32.mrb[0].mxu0
        %998 = vmatprep.mubr.bf16.mxu0 %v463
        %999 = vmatmul.mubr.bf16.gmra.mrb[0].mxu0 %v462
        %v1000 = vpop.f32.mrb[0].mxu0
        %v1001 = vadd.f32 %v607, %v1000
        %v1002 = vpop.f32.mrb[0].mxu0
        %v1003 = vpop.f32.mrb[0].mxu0
        %v1004 = vadd.f32 %v607, %v1003
        %v1005 = vpop.f32.mrb[0].mxu0
        %1006 = vmatprep.mubr.bf16.mxu0 %v470
        %1007 = vmatmul.mubr.bf16.gmra.mrb[0].mxu0 %v469
        %v1008 = vpop.f32.mrb[0].mxu0
        %v1009 = vadd.f32 %v607, %v1008
        %v1010 = vpop.f32.mrb[0].mxu0
        %v1011 = vpop.f32.mrb[0].mxu0
        %v1012 = vadd.f32 %v607, %v1011
        %v1013 = vpop.f32.mrb[0].mxu0
        %1014 = vmatprep.mubr.bf16.mxu0 %v477
        %1015 = vmatmul.mubr.bf16.gmra.mrb[0].mxu0 %v476
        %v1016 = vpop.f32.mrb[0].mxu0
        %v1017 = vadd.f32 %v607, %v1016
        %v1018 = vpop.f32.mrb[0].mxu0
        %v1019 = vpop.f32.mrb[0].mxu0
        %v1020 = vadd.f32 %v607, %v1019
        %v1021 = vpop.f32.mrb[0].mxu0
        %1022 = vmatprep.mubr.bf16.mxu0 %v484
        %1023 = vmatmul.mubr.bf16.gmra.mrb[0].mxu0 %v483
        %v1024 = vpop.f32.mrb[0].mxu0
        %v1025 = vadd.f32 %v607, %v1024
        %v1026 = vpop.f32.mrb[0].mxu0
        %v1027 = vpop.f32.mrb[0].mxu0
        %v1028 = vadd.f32 %v607, %v1027
        %v1029 = vpop.f32.mrb[0].mxu0
        %1030 = vmatprep.mubr.bf16.mxu0 %v491
        %1031 = vmatmul.mubr.bf16.gmra.mrb[0].mxu0 %v490
        %v1032 = vpop.f32.mrb[0].mxu0
        %v1033 = vadd.f32 %v607, %v1032
        %v1034 = vpop.f32.mrb[0].mxu0
        %v1035 = vpop.f32.mrb[0].mxu0
        %v1036 = vadd.f32 %v607, %v1035
        %v1037 = vpop.f32.mrb[0].mxu0
        %1038 = vmatprep.mubr.bf16.mxu0 %v498
        %1039 = vmatmul.mubr.bf16.gmra.mrb[0].mxu0 %v497
        %v1040 = vpop.f32.mrb[0].mxu0
        %v1041 = vadd.f32 %v607, %v1040
        %v1042 = vpop.f32.mrb[0].mxu0
        %v1043 = vpop.f32.mrb[0].mxu0
        %v1044 = vpop.f32.mrb[0].mxu0
        %1045 = vdwg.mxu0
        %1046 = vmatprep.subr.bf16.mxu0 0
        %1047 = vmatpush1.bf16.msra.mxu0 %v821
        %1048 = vmatprep.subr.bf16.mxu0 0
        %1049 = vmatpush1.bf16.msra.mxu0 %v822
        %1050 = vmatprep.subr.bf16.mxu0 0
        %1051 = vmatpush1.bf16.msra.mxu0 %v823
        %1052 = vmatprep.subr.bf16.mxu0 0
        %1053 = vmatpush1.bf16.msra.mxu0 %v824
        %1054 = vmatprep.subr.bf16.mxu0 0
        %1055 = vmatpush1.bf16.msra.mxu0 %v825
        %1056 = vmatprep.subr.bf16.mxu0 0
        %1057 = vmatpush1.bf16.msra.mxu0 %v826
        %1058 = vmatprep.subr.bf16.mxu0 0
        %1059 = vmatpush1.bf16.msra.mxu0 %v827
        %1060 = vmatprep.subr.bf16.mxu0 0
        %1061 = vmatpush1.bf16.msra.mxu0 %v828
        %1062 = vmatprep.subr.bf16.mxu0 0
        %1063 = vmatpush1.bf16.msra.mxu0 %v829
        %1064 = vmatprep.subr.bf16.mxu0 0
        %1065 = vmatpush1.bf16.msra.mxu0 %v830
        %1066 = vmatprep.subr.bf16.mxu0 0
        %1067 = vmatpush1.bf16.msra.mxu0 %v831
        %1068 = vmatprep.subr.bf16.mxu0 0
        %1069 = vmatpush1.bf16.msra.mxu0 %v832
        %1070 = vmatprep.subr.bf16.mxu0 0
        %1071 = vmatpush1.bf16.msra.mxu0 %v833
        %1072 = vmatprep.subr.bf16.mxu0 0
        %1073 = vmatpush1.bf16.msra.mxu0 %v834
        %1074 = vmatprep.subr.bf16.mxu0 0
        %1075 = vmatpush1.bf16.msra.mxu0 %v835
        %1076 = vmatprep.subr.bf16.mxu0 0
        %1077 = vmatpush1.bf16.msra.mxu0 %v836
        %1078 = vmatprep.mubr.bf16.mxu0 %v437
        %1079 = vmatmul.mubr.bf16.gmra.mrb[0].mxu0 %v436
        %v1080 = vpop.f32.mrb[0].mxu0
        %v1081 = vadd.f32 %v969, %v1080
        %v1082 = vpop.f32.mrb[0].mxu0
        %v1083 = vpop.f32.mrb[0].mxu0
        %v1084 = vadd.f32 %v972, %v1083
        %v1085 = vpop.f32.mrb[0].mxu0
        %1086 = vmatprep.mubr.bf16.mxu0 %v444
        %1087 = vmatmul.mubr.bf16.gmra.mrb[0].mxu0 %v443
        %v1088 = vpop.f32.mrb[0].mxu0
        %v1089 = vadd.f32 %v977, %v1088
        %v1090 = vpop.f32.mrb[0].mxu0
        %v1091 = vpop.f32.mrb[0].mxu0
        %v1092 = vadd.f32 %v980, %v1091
        %v1093 = vpop.f32.mrb[0].mxu0
        %1094 = vmatprep.mubr.bf16.mxu0 %v451
        %1095 = vmatmul.mubr.bf16.gmra.mrb[0].mxu0 %v450
        %v1096 = vpop.f32.mrb[0].mxu0
        %v1097 = vadd.f32 %v985, %v1096
        %v1098 = vpop.f32.mrb[0].mxu0
        %v1099 = vpop.f32.mrb[0].mxu0
        %v1100 = vadd.f32 %v988, %v1099
        %v1101 = vpop.f32.mrb[0].mxu0
        %1102 = vmatprep.mubr.bf16.mxu0 %v458
        %1103 = vmatmul.mubr.bf16.gmra.mrb[0].mxu0 %v457
        %v1104 = vpop.f32.mrb[0].mxu0
        %v1105 = vadd.f32 %v993, %v1104
        %v1106 = vpop.f32.mrb[0].mxu0
        %v1107 = vpop.f32.mrb[0].mxu0
        %v1108 = vadd.f32 %v996, %v1107
        %v1109 = vpop.f32.mrb[0].mxu0
        %1110 = vmatprep.mubr.bf16.mxu0 %v465
        %1111 = vmatmul.mubr.bf16.gmra.mrb[0].mxu0 %v464
        %v1112 = vpop.f32.mrb[0].mxu0
        %v1113 = vadd.f32 %v1001, %v1112
        %v1114 = vpop.f32.mrb[0].mxu0
        %v1115 = vpop.f32.mrb[0].mxu0
        %v1116 = vadd.f32 %v1004, %v1115
        %v1117 = vpop.f32.mrb[0].mxu0
        %1118 = vmatprep.mubr.bf16.mxu0 %v472
        %1119 = vmatmul.mubr.bf16.gmra.mrb[0].mxu0 %v471
        %v1120 = vpop.f32.mrb[0].mxu0
        %v1121 = vadd.f32 %v1009, %v1120
        %v1122 = vpop.f32.mrb[0].mxu0
        %v1123 = vpop.f32.mrb[0].mxu0
        %v1124 = vadd.f32 %v1012, %v1123
        %v1125 = vpop.f32.mrb[0].mxu0
        %1126 = vmatprep.mubr.bf16.mxu0 %v479
        %1127 = vmatmul.mubr.bf16.gmra.mrb[0].mxu0 %v478
        %v1128 = vpop.f32.mrb[0].mxu0
        %v1129 = vadd.f32 %v1017, %v1128
        %v1130 = vpop.f32.mrb[0].mxu0
        %v1131 = vpop.f32.mrb[0].mxu0
        %v1132 = vadd.f32 %v1020, %v1131
        %v1133 = vpop.f32.mrb[0].mxu0
        %1134 = vmatprep.mubr.bf16.mxu0 %v486
        %1135 = vmatmul.mubr.bf16.gmra.mrb[0].mxu0 %v485
        %v1136 = vpop.f32.mrb[0].mxu0
        %v1137 = vadd.f32 %v1025, %v1136
        %v1138 = vpop.f32.mrb[0].mxu0
        %v1139 = vpop.f32.mrb[0].mxu0
        %v1140 = vadd.f32 %v1028, %v1139
        %v1141 = vpop.f32.mrb[0].mxu0
        %1142 = vmatprep.mubr.bf16.mxu0 %v493
        %1143 = vmatmul.mubr.bf16.gmra.mrb[0].mxu0 %v492
        %v1144 = vpop.f32.mrb[0].mxu0
        %v1145 = vadd.f32 %v1033, %v1144
        %v1146 = vpop.f32.mrb[0].mxu0
        %v1147 = vpop.f32.mrb[0].mxu0
        %v1148 = vadd.f32 %v1036, %v1147
        %v1149 = vpop.f32.mrb[0].mxu0
        %1150 = vmatprep.mubr.bf16.mxu0 %v500
        %1151 = vmatmul.mubr.bf16.gmra.mrb[0].mxu0 %v499
        %v1152 = vpop.f32.mrb[0].mxu0
        %v1153 = vadd.f32 %v1041, %v1152
        %v1154 = vpop.f32.mrb[0].mxu0
        %v1155 = vpop.f32.mrb[0].mxu0
        %v1156 = vpop.f32.mrb[0].mxu0
        %1157 = vdwg.mxu0
        %1158 = vmatprep.subr.bf16.mxu0 0
        %1159 = vmatpush1.bf16.msra.mxu0 %v837
        %1160 = vmatprep.subr.bf16.mxu0 0
        %1161 = vmatpush1.bf16.msra.mxu0 %v838
        %1162 = vmatprep.subr.bf16.mxu0 0
        %1163 = vmatpush1.bf16.msra.mxu0 %v839
        %1164 = vmatprep.subr.bf16.mxu0 0
        %1165 = vmatpush1.bf16.msra.mxu0 %v840
        %1166 = vmatprep.subr.bf16.mxu0 0
        %1167 = vmatpush1.bf16.msra.mxu0 %v841
        %1168 = vmatprep.subr.bf16.mxu0 0
        %1169 = vmatpush1.bf16.msra.mxu0 %v842
        %1170 = vmatprep.subr.bf16.mxu0 0
        %1171 = vmatpush1.bf16.msra.mxu0 %v843
        %1172 = vmatprep.subr.bf16.mxu0 0
        %1173 = vmatpush1.bf16.msra.mxu0 %v844
        %1174 = vmatprep.subr.bf16.mxu0 0
        %1175 = vmatpush1.bf16.msra.mxu0 %v845
        %1176 = vmatprep.subr.bf16.mxu0 0
        %1177 = vmatpush1.bf16.msra.mxu0 %v846
        %1178 = vmatprep.subr.bf16.mxu0 0
        %1179 = vmatpush1.bf16.msra.mxu0 %v847
        %1180 = vmatprep.subr.bf16.mxu0 0
        %1181 = vmatpush1.bf16.msra.mxu0 %v848
        %1182 = vmatprep.subr.bf16.mxu0 0
        %1183 = vmatpush1.bf16.msra.mxu0 %v849
        %1184 = vmatprep.subr.bf16.mxu0 0
        %1185 = vmatpush1.bf16.msra.mxu0 %v850
        %1186 = vmatprep.subr.bf16.mxu0 0
        %1187 = vmatpush1.bf16.msra.mxu0 %v851
        %1188 = vmatprep.subr.bf16.mxu0 0
        %1189 = vmatpush1.bf16.msra.mxu0 %v852
        %1190 = vmatprep.mubr.bf16.mxu0 %v439
        %1191 = vmatmul.mubr.bf16.gmra.mrb[0].mxu0 %v438
        %v1192 = vpop.f32.mrb[0].mxu0
        %v1193 = vadd.f32 %v1081, %v1192
        %v1194 = vpop.f32.mrb[0].mxu0
        %v1195 = vpop.f32.mrb[0].mxu0
        %v1196 = vadd.f32 %v1084, %v1195
        %v1197 = vpop.f32.mrb[0].mxu0
        %1198 = vmatprep.mubr.bf16.mxu0 %v446
        %1199 = vmatmul.mubr.bf16.gmra.mrb[0].mxu0 %v445
        %v1200 = vpop.f32.mrb[0].mxu0
        %v1201 = vadd.f32 %v1089, %v1200
        %v1202 = vpop.f32.mrb[0].mxu0
        %v1203 = vpop.f32.mrb[0].mxu0
        %v1204 = vadd.f32 %v1092, %v1203
        %v1205 = vpop.f32.mrb[0].mxu0
        %1206 = vmatprep.mubr.bf16.mxu0 %v453
        %1207 = vmatmul.mubr.bf16.gmra.mrb[0].mxu0 %v452
        %v1208 = vpop.f32.mrb[0].mxu0
        %v1209 = vadd.f32 %v1097, %v1208
        %v1210 = vpop.f32.mrb[0].mxu0
        %v1211 = vpop.f32.mrb[0].mxu0
        %v1212 = vadd.f32 %v1100, %v1211
        %v1213 = vpop.f32.mrb[0].mxu0
        %1214 = vmatprep.mubr.bf16.mxu0 %v460
        %1215 = vmatmul.mubr.bf16.gmra.mrb[0].mxu0 %v459
        %v1216 = vpop.f32.mrb[0].mxu0
        %v1217 = vadd.f32 %v1105, %v1216
        %v1218 = vpop.f32.mrb[0].mxu0
        %v1219 = vpop.f32.mrb[0].mxu0
        %v1220 = vadd.f32 %v1108, %v1219
        %v1221 = vpop.f32.mrb[0].mxu0
        %1222 = vmatprep.mubr.bf16.mxu0 %v467
        %1223 = vmatmul.mubr.bf16.gmra.mrb[0].mxu0 %v466
        %v1224 = vpop.f32.mrb[0].mxu0
        %v1225 = vadd.f32 %v1113, %v1224
        %v1226 = vpop.f32.mrb[0].mxu0
        %v1227 = vpop.f32.mrb[0].mxu0
        %v1228 = vadd.f32 %v1116, %v1227
        %v1229 = vpop.f32.mrb[0].mxu0
        %1230 = vmatprep.mubr.bf16.mxu0 %v474
        %1231 = vmatmul.mubr.bf16.gmra.mrb[0].mxu0 %v473
        %v1232 = vpop.f32.mrb[0].mxu0
        %v1233 = vadd.f32 %v1121, %v1232
        %v1234 = vpop.f32.mrb[0].mxu0
        %v1235 = vpop.f32.mrb[0].mxu0
        %v1236 = vadd.f32 %v1124, %v1235
        %v1237 = vpop.f32.mrb[0].mxu0
        %1238 = vmatprep.mubr.bf16.mxu0 %v481
        %1239 = vmatmul.mubr.bf16.gmra.mrb[0].mxu0 %v480
        %v1240 = vpop.f32.mrb[0].mxu0
        %v1241 = vadd.f32 %v1129, %v1240
        %v1242 = vpop.f32.mrb[0].mxu0
        %v1243 = vpop.f32.mrb[0].mxu0
        %v1244 = vadd.f32 %v1132, %v1243
        %v1245 = vpop.f32.mrb[0].mxu0
        %1246 = vmatprep.mubr.bf16.mxu0 %v488
        %1247 = vmatmul.mubr.bf16.gmra.mrb[0].mxu0 %v487
        %v1248 = vpop.f32.mrb[0].mxu0
        %v1249 = vadd.f32 %v1137, %v1248
        %v1250 = vpop.f32.mrb[0].mxu0
        %v1251 = vpop.f32.mrb[0].mxu0
        %v1252 = vadd.f32 %v1140, %v1251
        %v1253 = vpop.f32.mrb[0].mxu0
        %1254 = vmatprep.mubr.bf16.mxu0 %v495
        %1255 = vmatmul.mubr.bf16.gmra.mrb[0].mxu0 %v494
        %v1256 = vpop.f32.mrb[0].mxu0
        %v1257 = vadd.f32 %v1145, %v1256
        %v1258 = vpop.f32.mrb[0].mxu0
        %v1259 = vpop.f32.mrb[0].mxu0
        %v1260 = vadd.f32 %v1148, %v1259
        %v1261 = vpop.f32.mrb[0].mxu0
        %1262 = vmatprep.mubr.bf16.mxu0 %v502
        %1263 = vmatmul.mubr.bf16.gmra.mrb[0].mxu0 %v501
        %v1264 = vpop.f32.mrb[0].mxu0
        %v1265 = vadd.f32 %v1153, %v1264
        %v1266 = vpop.f32.mrb[0].mxu0
        %v1267 = vpop.f32.mrb[0].mxu0
        %v1268 = vpop.f32.mrb[0].mxu0
        %1269 = vdwg.mxu0
        %1270 = vmatprep.subr.bf16.mxu0 0
        %1271 = vmatpush1.bf16.msra.mxu0 %v853
        %1272 = vmatprep.subr.bf16.mxu0 0
        %1273 = vmatpush1.bf16.msra.mxu0 0
        %1274 = vmatprep.subr.bf16.mxu0 0
        %1275 = vmatpush1.bf16.msra.mxu0 0
        %1276 = vmatprep.subr.bf16.mxu0 0
        %1277 = vmatpush1.bf16.msra.mxu0 0
        %1278 = vmatprep.subr.bf16.mxu0 0
        %1279 = vmatpush1.bf16.msra.mxu0 0
        %1280 = vmatprep.subr.bf16.mxu0 0
        %1281 = vmatpush1.bf16.msra.mxu0 0
        %1282 = vmatprep.subr.bf16.mxu0 0
        %1283 = vmatpush1.bf16.msra.mxu0 0
        %1284 = vmatprep.subr.bf16.mxu0 0
        %1285 = vmatpush1.bf16.msra.mxu0 0
        %1286 = vmatprep.subr.bf16.mxu0 0
        %1287 = vmatpush1.bf16.msra.mxu0 0
        %1288 = vmatprep.subr.bf16.mxu0 0
        %1289 = vmatpush1.bf16.msra.mxu0 0
        %1290 = vmatprep.subr.bf16.mxu0 0
        %1291 = vmatpush1.bf16.msra.mxu0 0
        %1292 = vmatprep.subr.bf16.mxu0 0
        %1293 = vmatpush1.bf16.msra.mxu0 0
        %1294 = vmatprep.subr.bf16.mxu0 0
        %1295 = vmatpush1.bf16.msra.mxu0 0
        %1296 = vmatprep.subr.bf16.mxu0 0
        %1297 = vmatpush1.bf16.msra.mxu0 0
        %1298 = vmatprep.subr.bf16.mxu0 0
        %1299 = vmatpush1.bf16.msra.mxu0 0
        %1300 = vmatprep.subr.bf16.mxu0 0
        %1301 = vmatpush1.bf16.msra.mxu0 0
        %1302 = vmatprep.mubr.bf16.mxu0 0
        %1303 = vmatmul.mubr.bf16.gmra.mrb[0].mxu0 %v905
        %v1304 = vpop.f32.mrb[0].mxu0
        %v1305 = vadd.f32 %v1193, %v1304
        %v1306 = vpop.f32.mrb[0].mxu0
        %v1307 = vpop.f32.mrb[0].mxu0
        %v1308 = vadd.f32 %v1196, %v1307
        %v1309 = vpop.f32.mrb[0].mxu0
        %1310 = vmatprep.mubr.bf16.mxu0 0
        %1311 = vmatmul.mubr.bf16.gmra.mrb[0].mxu0 %v908
        %v1312 = vpop.f32.mrb[0].mxu0
        %v1313 = vadd.f32 %v1201, %v1312
        %v1314 = vpop.f32.mrb[0].mxu0
        %v1315 = vpop.f32.mrb[0].mxu0
        %v1316 = vadd.f32 %v1204, %v1315
        %v1317 = vpop.f32.mrb[0].mxu0
        %1318 = vmatprep.mubr.bf16.mxu0 0
        %1319 = vmatmul.mubr.bf16.gmra.mrb[0].mxu0 %v911
        %v1320 = vpop.f32.mrb[0].mxu0
        %v1321 = vadd.f32 %v1209, %v1320
        %v1322 = vpop.f32.mrb[0].mxu0
        %v1323 = vpop.f32.mrb[0].mxu0
        %v1324 = vadd.f32 %v1212, %v1323
        %v1325 = vpop.f32.mrb[0].mxu0
        %1326 = vmatprep.mubr.bf16.mxu0 0
        %1327 = vmatmul.mubr.bf16.gmra.mrb[0].mxu0 %v914
        %v1328 = vpop.f32.mrb[0].mxu0
        %v1329 = vadd.f32 %v1217, %v1328
        %v1330 = vpop.f32.mrb[0].mxu0
        %v1331 = vpop.f32.mrb[0].mxu0
        %v1332 = vadd.f32 %v1220, %v1331
        %v1333 = vpop.f32.mrb[0].mxu0
        %1334 = vmatprep.mubr.bf16.mxu0 0
        %1335 = vmatmul.mubr.bf16.gmra.mrb[0].mxu0 %v917
        %v1336 = vpop.f32.mrb[0].mxu0
        %v1337 = vadd.f32 %v1225, %v1336
        %v1338 = vpop.f32.mrb[0].mxu0
        %v1339 = vpop.f32.mrb[0].mxu0
        %v1340 = vadd.f32 %v1228, %v1339
        %v1341 = vpop.f32.mrb[0].mxu0
        %1342 = vmatprep.mubr.bf16.mxu0 0
        %1343 = vmatmul.mubr.bf16.gmra.mrb[0].mxu0 %v920
        %v1344 = vpop.f32.mrb[0].mxu0
        %v1345 = vadd.f32 %v1233, %v1344
        %v1346 = vpop.f32.mrb[0].mxu0
        %v1347 = vpop.f32.mrb[0].mxu0
        %v1348 = vadd.f32 %v1236, %v1347
        %v1349 = vpop.f32.mrb[0].mxu0
        %1350 = vmatprep.mubr.bf16.mxu0 0
        %1351 = vmatmul.mubr.bf16.gmra.mrb[0].mxu0 %v923
        %v1352 = vpop.f32.mrb[0].mxu0
        %v1353 = vadd.f32 %v1241, %v1352
        %v1354 = vpop.f32.mrb[0].mxu0
        %v1355 = vpop.f32.mrb[0].mxu0
        %v1356 = vadd.f32 %v1244, %v1355
        %v1357 = vpop.f32.mrb[0].mxu0
        %1358 = vmatprep.mubr.bf16.mxu0 0
        %1359 = vmatmul.mubr.bf16.gmra.mrb[0].mxu0 %v926
        %v1360 = vpop.f32.mrb[0].mxu0
        %v1361 = vadd.f32 %v1249, %v1360
        %v1362 = vpop.f32.mrb[0].mxu0
        %v1363 = vpop.f32.mrb[0].mxu0
        %v1364 = vadd.f32 %v1252, %v1363
        %v1365 = vpop.f32.mrb[0].mxu0
        %1366 = vmatprep.mubr.bf16.mxu0 0
        %1367 = vmatmul.mubr.bf16.gmra.mrb[0].mxu0 %v929
        %v1368 = vpop.f32.mrb[0].mxu0
        %v1369 = vadd.f32 %v1257, %v1368
        %v1370 = vpop.f32.mrb[0].mxu0
        %v1371 = vpop.f32.mrb[0].mxu0
        %v1372 = vadd.f32 %v1260, %v1371
        %v1373 = vpop.f32.mrb[0].mxu0
        %1374 = vmatprep.mubr.bf16.mxu0 0
        %1375 = vmatmul.mubr.bf16.gmra.mrb[0].mxu0 %v932
        %v1376 = vpop.f32.mrb[0].mxu0
        %v1377 = vadd.f32 %v1265, %v1376
        %v1378 = vpop.f32.mrb[0].mxu0
        %v1379 = vpop.f32.mrb[0].mxu0
        %v1380 = vpop.f32.mrb[0].mxu0
        %1381 = vdwg.mxu0
        %v1382 = vmax.f32 %v1305, 0.0
        %v1383 = vmax.f32 %v1308, 0.0
        %v1384 = vmax.f32 %v1313, 0.0
        %v1385 = vmax.f32 %v1316, 0.0
        %v1386 = vmax.f32 %v1321, 0.0
        %v1387 = vmax.f32 %v1324, 0.0
        %v1388 = vmax.f32 %v1329, 0.0
        %v1389 = vmax.f32 %v1332, 0.0
        %v1390 = vmax.f32 %v1337, 0.0
        %v1391 = vmax.f32 %v1340, 0.0
        %v1392 = vmax.f32 %v1345, 0.0
        %v1393 = vmax.f32 %v1348, 0.0
        %v1394 = vmax.f32 %v1353, 0.0
        %v1395 = vmax.f32 %v1356, 0.0
        %v1396 = vmax.f32 %v1361, 0.0
        %v1397 = vmax.f32 %v1364, 0.0
        %v1398 = vmax.f32 %v1369, 0.0
        %v1399 = vmax.f32 %v1372, 0.0
        %v1400 = vmax.f32 %v1377, 0.0
        %v1401 = vpack.c.bf16 %v1383, %v1382
        %v1402 = vpack.c.bf16 %v1385, %v1384
        %v1403 = vpack.c.bf16 %v1387, %v1386
        %v1404 = vpack.c.bf16 %v1389, %v1388
        %v1405 = vpack.c.bf16 %v1391, %v1390
        %v1406 = vpack.c.bf16 %v1393, %v1392
        %v1407 = vpack.c.bf16 %v1395, %v1394
        %v1408 = vpack.c.bf16 %v1397, %v1396
        %v1409 = vpack.c.bf16 %v1399, %v1398
        %v1410 = vpack.c.bf16 %v1400, %v1400
        %v1411 = vld [vmem:[#allocation8] sm:$0xf]
        %v1412 = vld [vmem:[#allocation8 + $0x4] sm:$0xf]
        %v1413 = vld [vmem:[#allocation8 + $0x8] sm:$0xf]
        %v1414 = vld [vmem:[#allocation8 + $0xc] sm:$0xf]
        %v1415 = vld [vmem:[#allocation8 + $0x10] sm:$0xf]
        %v1416 = vld [vmem:[#allocation8 + $0x14] sm:$0xf]
        %v1417 = vld [vmem:[#allocation8 + $0x18] sm:$0xf]
        %v1418 = vld [vmem:[#allocation8 + $0x1c] sm:$0xf]
        %v1419 = vld [vmem:[#allocation8 + $0x20] sm:$0xf]
        %v1420 = vld [vmem:[#allocation8 + $0x24] sm:$0xf]
        %v1421 = vld [vmem:[#allocation8 + $0x28] sm:$0xf]
        %v1422 = vld [vmem:[#allocation8 + $0x2c] sm:$0xf]
        %v1423 = vld [vmem:[#allocation8 + $0x30] sm:$0xf]
        %v1424 = vld [vmem:[#allocation8 + $0x34] sm:$0xf]
        %v1425 = vld [vmem:[#allocation8 + $0x38] sm:$0xf]
        %v1426 = vld [vmem:[#allocation8 + $0x3c] sm:$0xf]
        %v1427 = vld [vmem:[#allocation10] sm:$0x1]
        %v1429 = vlaneseq
        %v1430 = vshrl.u32 %v1429, 7
        %v1431 = vsub.s32 0, %v1430
        %v1432 = vrot.slane %v1427, %v1431
        %v1450 = vunpack.c.l.b16 %v1411
        %v1451 = vunpack.c.l.b16 %v1412
        %v1452 = vunpack.c.l.b16 %v1413
        %v1453 = vunpack.c.l.b16 %v1414
        %v1454 = vunpack.c.l.b16 %v1415
        %v1455 = vunpack.c.l.b16 %v1416
        %v1456 = vunpack.c.l.b16 %v1417
        %v1457 = vunpack.c.l.b16 %v1418
        %v1458 = vunpack.c.l.b16 %v1419
        %v1459 = vunpack.c.l.b16 %v1420
        %v1460 = vunpack.c.l.b16 %v1421
        %v1461 = vunpack.c.l.b16 %v1422
        %v1462 = vunpack.c.l.b16 %v1423
        %v1463 = vunpack.c.l.b16 %v1424
        %v1464 = vunpack.c.l.b16 %v1425
        %v1465 = vunpack.c.l.b16 %v1426
        %v1466 = vpack.c.b16 %v1451, %v1450
        %v1467 = vpack.c.b16 %v1453, %v1452
        %v1468 = vpack.c.b16 %v1455, %v1454
        %v1469 = vpack.c.b16 %v1457, %v1456
        %v1470 = vpack.c.b16 %v1459, %v1458
        %v1471 = vpack.c.b16 %v1461, %v1460
        %v1472 = vpack.c.b16 %v1463, %v1462
        %v1473 = vpack.c.b16 %v1465, %v1464
        %1482 = vmatprep.subr.bf16.mxu0 0
        %1483 = vmatpush1.bf16.msra.mxu0 %v1466
        %1484 = vmatprep.subr.bf16.mxu0 0
        %1485 = vmatpush1.bf16.msra.mxu0 %v1467
        %1486 = vmatprep.subr.bf16.mxu0 0
        %1487 = vmatpush1.bf16.msra.mxu0 %v1468
        %1488 = vmatprep.subr.bf16.mxu0 0
        %1489 = vmatpush1.bf16.msra.mxu0 %v1469
        %1490 = vmatprep.subr.bf16.mxu0 0
        %1491 = vmatpush1.bf16.msra.mxu0 %v1470
        %1492 = vmatprep.subr.bf16.mxu0 0
        %1493 = vmatpush1.bf16.msra.mxu0 %v1471
        %1494 = vmatprep.subr.bf16.mxu0 0
        %1495 = vmatpush1.bf16.msra.mxu0 %v1472
        %1496 = vmatprep.subr.bf16.mxu0 0
        %1497 = vmatpush1.bf16.msra.mxu0 %v1473
        %1498 = vmatprep.subr.bf16.mxu0 0
        %1499 = vmatpush1.bf16.msra.mxu0 0
        %1500 = vmatprep.subr.bf16.mxu0 0
        %1501 = vmatpush1.bf16.msra.mxu0 0
        %1502 = vmatprep.subr.bf16.mxu0 0
        %1503 = vmatpush1.bf16.msra.mxu0 0
        %1504 = vmatprep.subr.bf16.mxu0 0
        %1505 = vmatpush1.bf16.msra.mxu0 0
        %1506 = vmatprep.subr.bf16.mxu0 0
        %1507 = vmatpush1.bf16.msra.mxu0 0
        %1508 = vmatprep.subr.bf16.mxu0 0
        %1509 = vmatpush1.bf16.msra.mxu0 0
        %1510 = vmatprep.subr.bf16.mxu0 0
        %1511 = vmatpush1.bf16.msra.mxu0 0
        %1512 = vmatprep.subr.bf16.mxu0 0
        %1513 = vmatpush1.bf16.msra.mxu0 0
        %1514 = vmatprep.mubr.bf16.mxu0 0
        %1515 = vmatmul.mubr.bf16.gmra.mrb[0].mxu0 %v1401
        %v1516 = vpop.f32.mrb[0].mxu0
        %v1517 = vadd.f32 %v1432, %v1516
        %v1518 = vpop.f32.mrb[0].mxu0
        %v1519 = vpop.f32.mrb[0].mxu0
        %v1520 = vadd.f32 %v1432, %v1519
        %v1521 = vpop.f32.mrb[0].mxu0
        %1522 = vmatprep.mubr.bf16.mxu0 0
        %1523 = vmatmul.mubr.bf16.gmra.mrb[0].mxu0 %v1402
        %v1524 = vpop.f32.mrb[0].mxu0
        %v1525 = vadd.f32 %v1432, %v1524
        %v1526 = vpop.f32.mrb[0].mxu0
        %v1527 = vpop.f32.mrb[0].mxu0
        %v1528 = vadd.f32 %v1432, %v1527
        %v1529 = vpop.f32.mrb[0].mxu0
        %1530 = vmatprep.mubr.bf16.mxu0 0
        %1531 = vmatmul.mubr.bf16.gmra.mrb[0].mxu0 %v1403
        %v1532 = vpop.f32.mrb[0].mxu0
        %v1533 = vadd.f32 %v1432, %v1532
        %v1534 = vpop.f32.mrb[0].mxu0
        %v1535 = vpop.f32.mrb[0].mxu0
        %v1536 = vadd.f32 %v1432, %v1535
        %v1537 = vpop.f32.mrb[0].mxu0
        %1538 = vmatprep.mubr.bf16.mxu0 0
        %1539 = vmatmul.mubr.bf16.gmra.mrb[0].mxu0 %v1404
        %v1540 = vpop.f32.mrb[0].mxu0
        %v1541 = vadd.f32 %v1432, %v1540
        %v1542 = vpop.f32.mrb[0].mxu0
        %v1543 = vpop.f32.mrb[0].mxu0
        %v1544 = vadd.f32 %v1432, %v1543
        %v1545 = vpop.f32.mrb[0].mxu0
        %1546 = vmatprep.mubr.bf16.mxu0 0
        %1547 = vmatmul.mubr.bf16.gmra.mrb[0].mxu0 %v1405
        %v1548 = vpop.f32.mrb[0].mxu0
        %v1549 = vadd.f32 %v1432, %v1548
        %v1550 = vpop.f32.mrb[0].mxu0
        %v1551 = vpop.f32.mrb[0].mxu0
        %v1552 = vadd.f32 %v1432, %v1551
        %v1553 = vpop.f32.mrb[0].mxu0
        %1554 = vmatprep.mubr.bf16.mxu0 0
        %1555 = vmatmul.mubr.bf16.gmra.mrb[0].mxu0 %v1406
        %v1556 = vpop.f32.mrb[0].mxu0
        %v1557 = vadd.f32 %v1432, %v1556
        %v1558 = vpop.f32.mrb[0].mxu0
        %v1559 = vpop.f32.mrb[0].mxu0
        %v1560 = vadd.f32 %v1432, %v1559
        %v1561 = vpop.f32.mrb[0].mxu0
        %1562 = vmatprep.mubr.bf16.mxu0 0
        %1563 = vmatmul.mubr.bf16.gmra.mrb[0].mxu0 %v1407
        %v1564 = vpop.f32.mrb[0].mxu0
        %v1565 = vadd.f32 %v1432, %v1564
        %v1566 = vpop.f32.mrb[0].mxu0
        %v1567 = vpop.f32.mrb[0].mxu0
        %v1568 = vadd.f32 %v1432, %v1567
        %v1569 = vpop.f32.mrb[0].mxu0
        %1570 = vmatprep.mubr.bf16.mxu0 0
        %1571 = vmatmul.mubr.bf16.gmra.mrb[0].mxu0 %v1408
        %v1572 = vpop.f32.mrb[0].mxu0
        %v1573 = vadd.f32 %v1432, %v1572
        %v1574 = vpop.f32.mrb[0].mxu0
        %v1575 = vpop.f32.mrb[0].mxu0
        %v1576 = vadd.f32 %v1432, %v1575
        %v1577 = vpop.f32.mrb[0].mxu0
        %1578 = vmatprep.mubr.bf16.mxu0 0
        %1579 = vmatmul.mubr.bf16.gmra.mrb[0].mxu0 %v1409
        %v1580 = vpop.f32.mrb[0].mxu0
        %v1581 = vadd.f32 %v1432, %v1580
        %v1582 = vpop.f32.mrb[0].mxu0
        %v1583 = vpop.f32.mrb[0].mxu0
        %v1584 = vadd.f32 %v1432, %v1583
        %v1585 = vpop.f32.mrb[0].mxu0
        %1586 = vmatprep.mubr.bf16.mxu0 0
        %1587 = vmatmul.mubr.bf16.gmra.mrb[0].mxu0 %v1410
        %v1588 = vpop.f32.mrb[0].mxu0
        %v1589 = vadd.f32 %v1432, %v1588
        %v1590 = vpop.f32.mrb[0].mxu0
        %v1591 = vpop.f32.mrb[0].mxu0
        %v1592 = vpop.f32.mrb[0].mxu0
        %1593 = vdwg.mxu0
        %1594 = vmax.xlane.f32.xlu0 %v1517
        %v1595 = vpop.xlane.xlu0 %1594
        %1596 = vmax.xlane.f32.xlu0 %v1520
        %v1597 = vpop.xlane.xlu0 %1596
        %1598 = vmax.xlane.f32.xlu0 %v1525
        %v1599 = vpop.xlane.xlu0 %1598
        %1600 = vmax.xlane.f32.xlu0 %v1528
        %v1601 = vpop.xlane.xlu0 %1600
        %1602 = vmax.xlane.f32.xlu0 %v1533
        %v1603 = vpop.xlane.xlu0 %1602
        %1604 = vmax.xlane.f32.xlu0 %v1536
        %v1605 = vpop.xlane.xlu0 %1604
        %1606 = vmax.xlane.f32.xlu0 %v1541
        %v1607 = vpop.xlane.xlu0 %1606
        %1608 = vmax.xlane.f32.xlu0 %v1544
        %v1609 = vpop.xlane.xlu0 %1608
        %1610 = vmax.xlane.f32.xlu0 %v1549
        %v1611 = vpop.xlane.xlu0 %1610
        %1612 = vmax.xlane.f32.xlu0 %v1552
        %v1613 = vpop.xlane.xlu0 %1612
        %1614 = vmax.xlane.f32.xlu0 %v1557
        %v1615 = vpop.xlane.xlu0 %1614
        %1616 = vmax.xlane.f32.xlu0 %v1560
        %v1617 = vpop.xlane.xlu0 %1616
        %1618 = vmax.xlane.f32.xlu0 %v1565
        %v1619 = vpop.xlane.xlu0 %1618
        %1620 = vmax.xlane.f32.xlu0 %v1568
        %v1621 = vpop.xlane.xlu0 %1620
        %1622 = vmax.xlane.f32.xlu0 %v1573
        %v1623 = vpop.xlane.xlu0 %1622
        %1624 = vmax.xlane.f32.xlu0 %v1576
        %v1625 = vpop.xlane.xlu0 %1624
        %1626 = vmax.xlane.f32.xlu0 %v1581
        %v1627 = vpop.xlane.xlu0 %1626
        %1628 = vmax.xlane.f32.xlu0 %v1584
        %v1629 = vpop.xlane.xlu0 %1628
        %1630 = vmax.xlane.f32.xlu0 %v1589
        %v1631 = vpop.xlane.xlu0 %1630
        %v1632 = vsub.f32 %v1517, %v1595
        %v1633 = vsub.f32 %v1520, %v1597
        %v1634 = vsub.f32 %v1525, %v1599
        %v1635 = vsub.f32 %v1528, %v1601
        %v1636 = vsub.f32 %v1533, %v1603
        %v1637 = vsub.f32 %v1536, %v1605
        %v1638 = vsub.f32 %v1541, %v1607
        %v1639 = vsub.f32 %v1544, %v1609
        %v1640 = vsub.f32 %v1549, %v1611
        %v1641 = vsub.f32 %v1552, %v1613
        %v1642 = vsub.f32 %v1557, %v1615
        %v1643 = vsub.f32 %v1560, %v1617
        %v1644 = vsub.f32 %v1565, %v1619
        %v1645 = vsub.f32 %v1568, %v1621
        %v1646 = vsub.f32 %v1573, %v1623
        %v1647 = vsub.f32 %v1576, %v1625
        %v1648 = vsub.f32 %v1581, %v1627
        %v1649 = vsub.f32 %v1584, %v1629
        %v1650 = vsub.f32 %v1589, %v1631
        %v1651 = vmul.f32 %v1632, 1.442695
        %v1652 = vpow.pop %v1651
        %v1653 = vmul.f32 %v1633, 1.442695
        %v1654 = vpow.pop %v1653
        %v1655 = vmul.f32 %v1634, 1.442695
        %v1656 = vpow.pop %v1655
        %v1657 = vmul.f32 %v1635, 1.442695
        %v1658 = vpow.pop %v1657
        %v1659 = vmul.f32 %v1636, 1.442695
        %v1660 = vpow.pop %v1659
        %v1661 = vmul.f32 %v1637, 1.442695
        %v1662 = vpow.pop %v1661
        %v1663 = vmul.f32 %v1638, 1.442695
        %v1664 = vpow.pop %v1663
        %v1665 = vmul.f32 %v1639, 1.442695
        %v1666 = vpow.pop %v1665
        %v1667 = vmul.f32 %v1640, 1.442695
        %v1668 = vpow.pop %v1667
        %v1669 = vmul.f32 %v1641, 1.442695
        %v1670 = vpow.pop %v1669
        %v1671 = vmul.f32 %v1642, 1.442695
        %v1672 = vpow.pop %v1671
        %v1673 = vmul.f32 %v1643, 1.442695
        %v1674 = vpow.pop %v1673
        %v1675 = vmul.f32 %v1644, 1.442695
        %v1676 = vpow.pop %v1675
        %v1677 = vmul.f32 %v1645, 1.442695
        %v1678 = vpow.pop %v1677
        %v1679 = vmul.f32 %v1646, 1.442695
        %v1680 = vpow.pop %v1679
        %v1681 = vmul.f32 %v1647, 1.442695
        %v1682 = vpow.pop %v1681
        %v1683 = vmul.f32 %v1648, 1.442695
        %v1684 = vpow.pop %v1683
        %v1685 = vmul.f32 %v1649, 1.442695
        %v1686 = vpow.pop %v1685
        %v1687 = vmul.f32 %v1650, 1.442695
        %v1688 = vpow.pop %v1687
        %1689 = vadd.xlane.f32.xlu0 %v1652
        %v1690 = vpop.xlane.xlu0 %1689
        %1691 = vadd.xlane.f32.xlu0 %v1654
        %v1692 = vpop.xlane.xlu0 %1691
        %1693 = vadd.xlane.f32.xlu0 %v1656
        %v1694 = vpop.xlane.xlu0 %1693
        %1695 = vadd.xlane.f32.xlu0 %v1658
        %v1696 = vpop.xlane.xlu0 %1695
        %1697 = vadd.xlane.f32.xlu0 %v1660
        %v1698 = vpop.xlane.xlu0 %1697
        %1699 = vadd.xlane.f32.xlu0 %v1662
        %v1700 = vpop.xlane.xlu0 %1699
        %1701 = vadd.xlane.f32.xlu0 %v1664
        %v1702 = vpop.xlane.xlu0 %1701
        %1703 = vadd.xlane.f32.xlu0 %v1666
        %v1704 = vpop.xlane.xlu0 %1703
        %1705 = vadd.xlane.f32.xlu0 %v1668
        %v1706 = vpop.xlane.xlu0 %1705
        %1707 = vadd.xlane.f32.xlu0 %v1670
        %v1708 = vpop.xlane.xlu0 %1707
        %1709 = vadd.xlane.f32.xlu0 %v1672
        %v1710 = vpop.xlane.xlu0 %1709
        %1711 = vadd.xlane.f32.xlu0 %v1674
        %v1712 = vpop.xlane.xlu0 %1711
        %1713 = vadd.xlane.f32.xlu0 %v1676
        %v1714 = vpop.xlane.xlu0 %1713
        %1715 = vadd.xlane.f32.xlu0 %v1678
        %v1716 = vpop.xlane.xlu0 %1715
        %1717 = vadd.xlane.f32.xlu0 %v1680
        %v1718 = vpop.xlane.xlu0 %1717
        %1719 = vadd.xlane.f32.xlu0 %v1682
        %v1720 = vpop.xlane.xlu0 %1719
        %1721 = vadd.xlane.f32.xlu0 %v1684
        %v1722 = vpop.xlane.xlu0 %1721
        %1723 = vadd.xlane.f32.xlu0 %v1686
        %v1724 = vpop.xlane.xlu0 %1723
        %1725 = vadd.xlane.f32.xlu0 %v1688
        %v1726 = vpop.xlane.xlu0 %1725
        %v1727 = vrcp.pop %v1690
        %v1728 = vrcp.pop %v1692
        %v1729 = vrcp.pop %v1694
        %v1730 = vrcp.pop %v1696
        %v1731 = vrcp.pop %v1698
        %v1732 = vrcp.pop %v1700
        %v1733 = vrcp.pop %v1702
        %v1734 = vrcp.pop %v1704
        %v1735 = vrcp.pop %v1706
        %v1736 = vrcp.pop %v1708
        %v1737 = vrcp.pop %v1710
        %v1738 = vrcp.pop %v1712
        %v1739 = vrcp.pop %v1714
        %v1740 = vrcp.pop %v1716
        %v1741 = vrcp.pop %v1718
        %v1742 = vrcp.pop %v1720
        %v1743 = vrcp.pop %v1722
        %v1744 = vrcp.pop %v1724
        %v1745 = vrcp.pop %v1726
        %v1746 = vmul.f32 %v1652, %v1727
        %v1747 = vmul.f32 %v1654, %v1728
        %v1748 = vmul.f32 %v1656, %v1729
        %v1749 = vmul.f32 %v1658, %v1730
        %v1750 = vmul.f32 %v1660, %v1731
        %v1751 = vmul.f32 %v1662, %v1732
        %v1752 = vmul.f32 %v1664, %v1733
        %v1753 = vmul.f32 %v1666, %v1734
        %v1754 = vmul.f32 %v1668, %v1735
        %v1755 = vmul.f32 %v1670, %v1736
        %v1756 = vmul.f32 %v1672, %v1737
        %v1757 = vmul.f32 %v1674, %v1738
        %v1758 = vmul.f32 %v1676, %v1739
        %v1759 = vmul.f32 %v1678, %v1740
        %v1760 = vmul.f32 %v1680, %v1741
        %v1761 = vmul.f32 %v1682, %v1742
        %v1762 = vmul.f32 %v1684, %v1743
        %v1763 = vmul.f32 %v1686, %v1744
        %v1764 = vmul.f32 %v1688, %v1745
        %v1765 = vpack.c.bf16 %v1747, %v1746
        %v1766 = vpack.c.bf16 %v1749, %v1748
        %v1767 = vpack.c.bf16 %v1751, %v1750
        %v1768 = vpack.c.bf16 %v1753, %v1752
        %v1769 = vpack.c.bf16 %v1755, %v1754
        %v1770 = vpack.c.bf16 %v1757, %v1756
        %v1771 = vpack.c.bf16 %v1759, %v1758
        %v1772 = vpack.c.bf16 %v1761, %v1760
        %v1773 = vpack.c.bf16 %v1763, %v1762
        %v1774 = vpack.c.bf16 %v1764, %v1764
        %v1785 = vunpack.c.l.b16 %v1765
        %v1786 = vunpack.c.h.b16 %v1765
        %v1787 = vunpack.c.l.b16 %v1766
        %v1788 = vunpack.c.h.b16 %v1766
        %v1789 = vunpack.c.l.b16 %v1767
        %v1790 = vunpack.c.h.b16 %v1767
        %v1791 = vunpack.c.l.b16 %v1768
        %v1792 = vunpack.c.h.b16 %v1768
        %v1793 = vunpack.c.l.b16 %v1769
        %v1794 = vunpack.c.h.b16 %v1769
        %v1795 = vunpack.c.l.b16 %v1770
        %v1796 = vunpack.c.h.b16 %v1770
        %v1797 = vunpack.c.l.b16 %v1771
        %v1798 = vunpack.c.h.b16 %v1771
        %v1799 = vunpack.c.l.b16 %v1772
        %v1800 = vunpack.c.h.b16 %v1772
        %v1801 = vunpack.c.l.b16 %v1773
        %v1802 = vunpack.c.h.b16 %v1773
        %v1803 = vunpack.c.l.b16 %v1774
        %v1804 = vpack.c.b16 %v1785, %v1785
        %v1805 = vpack.c.b16 %v1786, %v1786
        %v1806 = vpack.c.b16 %v1787, %v1787
        %v1807 = vpack.c.b16 %v1788, %v1788
        %v1808 = vpack.c.b16 %v1789, %v1789
        %v1809 = vpack.c.b16 %v1790, %v1790
        %v1810 = vpack.c.b16 %v1791, %v1791
        %v1811 = vpack.c.b16 %v1792, %v1792
        %v1812 = vpack.c.b16 %v1793, %v1793
        %v1813 = vpack.c.b16 %v1794, %v1794
        %v1814 = vpack.c.b16 %v1795, %v1795
        %v1815 = vpack.c.b16 %v1796, %v1796
        %v1816 = vpack.c.b16 %v1797, %v1797
        %v1817 = vpack.c.b16 %v1798, %v1798
        %v1818 = vpack.c.b16 %v1799, %v1799
        %v1819 = vpack.c.b16 %v1800, %v1800
        %v1820 = vpack.c.b16 %v1801, %v1801
        %v1821 = vpack.c.b16 %v1802, %v1802
        %v1822 = vpack.c.b16 %v1803, %v1803
        %1842 = vst [vmem:[%s297] sm:$0xf] %v1804
        %1843 = vst [vmem:[%s297 + $0x4] sm:$0xf] %v1805
        %1844 = vst [vmem:[%s297 + $0x8] sm:$0xf] %v1806
        %1845 = vst [vmem:[%s297 + $0xc] sm:$0xf] %v1807
        %1846 = vst [vmem:[%s297 + $0x10] sm:$0xf] %v1808
        %1847 = vst [vmem:[%s297 + $0x14] sm:$0xf] %v1809
        %1848 = vst [vmem:[%s297 + $0x18] sm:$0xf] %v1810
        %1849 = vst [vmem:[%s297 + $0x1c] sm:$0xf] %v1811
        %1850 = vst [vmem:[%s297 + $0x20] sm:$0xf] %v1812
        %1851 = vst [vmem:[%s297 + $0x24] sm:$0xf] %v1813
        %1852 = vst [vmem:[%s297 + $0x28] sm:$0xf] %v1814
        %1853 = vst [vmem:[%s297 + $0x2c] sm:$0xf] %v1815
        %1854 = vst [vmem:[%s297 + $0x30] sm:$0xf] %v1816
        %1855 = vst [vmem:[%s297 + $0x34] sm:$0xf] %v1817
        %1856 = vst [vmem:[%s297 + $0x38] sm:$0xf] %v1818
        %1857 = vst [vmem:[%s297 + $0x3c] sm:$0xf] %v1819
        %1858 = vst [vmem:[%s297 + $0x40] sm:$0xf] %v1820
        %1859 = vst [vmem:[%s297 + $0x44] sm:$0xf] %v1821
        %1860 = vst [vmem:[%s297 + $0x48] sm:$0xf] %v1822
        %s1861 = sand.u32 %s142, 1
        %s1862 = scalar_lea.sflag [#allocation4], %s1861
        %s1863 = sand.u32 %s142, 1
        %s1864 = smul.addr %s1863, 76
        %s1865 = scalar_lea.vmem [#allocation11], %s1864
        // Predicated region
        $region61: #{tpu_custom_call.1} parent=39 // pred_check
          %p1866 = pneg %p152
        $region62: #{tpu_custom_call.1} parent=39 // pred_check_branch
          %1868 = sbr.rel (%p1866) target = $region64
        $region63: #{tpu_custom_call.1} parent=39 // pred_region
          %s1869 = smul.u32 19, %s24
          %s1871 = ssub.s32 1216, 1216
          %1872 = vsyncadd %s1862, %s1871
          %s1873 = smul.addr %s1869, 64
          %s1874 = scalar_lea.hbm %s5, %s1873
          %s1875 = sshll.u32 %s1865, 4
          %s1876 = int_to_ptr.vmem [resolvable:$true] %s1875
          %1881 = dma.vmem_to_hbm [thread:$0]  %s1876, 1216, %s1874, %s1862, 64, 64, 4
        $region64: #{tpu_custom_call.1} parent=39 // pred_fallthru
          _
      $region40: #{tpu_custom_call.1} parent=5 // pred_fallthru
        _
      %p1882 = scmp.le.s32.totalorder 2, %s19
      // Predicated region
      $region65: #{tpu_custom_call.1} parent=5 // pred_check
        %p1883 = pneg %p1882
      $region66: #{tpu_custom_call.1} parent=5 // pred_check_branch
        %1885 = sbr.rel (%p1883) target = $region68
      $region67: #{tpu_custom_call.1} parent=5 // pred_region
        %s1886 = ssub.s32 %s19, 2
        // Predicated region
        $region69: #{tpu_custom_call.1} parent=67 // pred_check
          %p1887 = pneg %p158
        $region70: #{tpu_custom_call.1} parent=67 // pred_check_branch
          %1889 = sbr.rel (%p1887) target = $region72
        $region71: #{tpu_custom_call.1} parent=67 // pred_region
          %s1890 = sand.u32 %s143, 1
          %s1891 = scalar_lea.sflag [#allocation4], %s1890
          %s1892 = sand.u32 %s143, 1
          %s1893 = smul.addr %s1892, 76
          %s1894 = scalar_lea.vmem [#allocation11], %s1893
          %1895 = dma.done %s1891, 1216
        $region72: #{tpu_custom_call.1} parent=67 // pred_fallthru
          _
      $region68: #{tpu_custom_call.1} parent=5 // pred_fallthru
        _
    $region6: #{tpu_custom_call.1} parent=1 // loop_footer
      %s23 = sadd.s32 1, %s19
    $region7: #{tpu_custom_call.1} parent=1 // loop_footer_branch
      %18 = sbr.rel target = $region3
    $region8: #{tpu_custom_call.1} parent=1 // loop_exit
      _
    %1896 = vsyncpa [#allocation3], 1
    %s1897 = scalar_lea.sflag [#allocation3], 1
    %1898 = vsyncpa %s1897, 1
    %1899 = vsyncpa [#allocation6], 1
    %1900 = vsyncpa [#allocation9], 1
    %1901 = vsyncpa [#allocation4], 1
    %s1902 = scalar_lea.sflag [#allocation4], 1
    %1903 = vsyncpa %s1902, 1

</llo_original>
